<compile_context>
chip_gen: v7x
topology: tpu7x:2x2x1
jax: 0.10.0
libtpu: 0.0.40
codegen_flags: <defaults>
</compile_context>

<pallas_src>
import math
import numpy as np
import jax
import jax.numpy as jnp
from jax.experimental import pallas as pl
from jax.experimental.pallas import tpu as pltpu

PI = math.pi


def _round_up(a, b):
    return (a + b - 1) // b * b


def cqt_frequencies(fmin, n_bins, bins_per_octave):
    """librosa.time_frequency.cqt_frequencies equivalent."""
    k = np.arange(n_bins, dtype=np.float64)
    return fmin * (2.0 ** (k / bins_per_octave))


def make_params(sr=16000, fmin=30, n_bins=256, bins_per_octave=32, hop_length=128):
    """Per-bin constants as (n_bins,) float32 vectors (same math as PyTorch)."""
    freqs = cqt_frequencies(fmin, n_bins, bins_per_octave)
    fixed_phase_diff = ((1.0 * freqs * hop_length / sr + 0.5) % 1 - 0.5) * 2.0 * np.pi
    scaling = 1.0 / np.log(freqs)
    fpd = jnp.asarray(fixed_phase_diff, dtype=jnp.float32)
    scl = jnp.asarray(scaling, dtype=jnp.float32)
    return fpd, scl


def _phase_diff_kernel(x_ref, aux_ref, o_ref):
    # x_ref:   (row_tile, t_tile)     current tile of phases
    # aux_ref: (1, row_tile, 3)       [:,0]=fixed_phase_diff [:,1]=scaling
    #                                 [:,2]=halo (first frame of NEXT time tile)
    # o_ref:   (row_tile, t_tile)
    x = x_ref[...].astype(jnp.float32)
    tt = x.shape[1]

    aux = aux_ref[0]                    # (row_tile, 3)
    fpd = aux[:, 0:1]
    scl = aux[:, 1:2]
    halo = aux[:, 2:3]

    # Bulk: next-frame values via an in-tile XLU rotate (the tile's last
    # column is wrong here; it is patched below).
    nxt = pltpu.roll(x, shift=tt - 1, axis=1)          # nxt[:, j] = x[:, (j+1) % tt]
    pd = nxt - x + fpd
    pd = jnp.where(pd > PI, pd - 2.0 * PI, pd)         # unwrap: fold > pi down
    pd = jnp.where(pd < -PI, pd + 2.0 * PI, pd)        #         fold < -pi up
    o_ref[...] = (pd * scl).astype(o_ref.dtype)

    # Patch: only the last column of the tile needs the cross-tile halo.
    pd_l = halo - x[:, tt - 1:tt] + fpd
    pd_l = jnp.where(pd_l > PI, pd_l - 2.0 * PI, pd_l)
    pd_l = jnp.where(pd_l < -PI, pd_l + 2.0 * PI, pd_l)
    o_ref[:, tt - 1:tt] = (pd_l * scl).astype(o_ref.dtype)


def phase_difference(x, fixed_phase_diff, scaling, *, t_tile=2048, row_tile=None,
                     out_dtype=None, vmem_limit_bytes=48 * 1024 * 1024):
    """x: (B, n_bins, T) angles in [-pi, pi] -> (B, n_bins, T-1).

    fixed_phase_diff / scaling: per-bin (n_bins,) float32 constants.
    """
    B, n_bins, T = x.shape
    assert T >= 2, "need at least 2 time frames"
    out_dtype = out_dtype or x.dtype

    R = B * n_bins          # batch fused into the row axis
    Tout = T - 1

    # --- tile sizing ---------------------------------------------------------
    # time tile: lane-dense (multiple of 128), capped at the requested width
    t_tile = max(128, min(_round_up(t_tile, 128), _round_up(Tout, 128)))
    n_t = pl.cdiv(Tout, t_tile)

    # row tile: target ~2 MiB blocks (past the DMA roofline knee), multiple
    # of 8 sublanes; 2x double-buffered (in+out) + roll/pd temporaries stay
    # well under the explicit 48 MiB VMEM limit on every generation.
    itemsize = jnp.dtype(x.dtype).itemsize
    if row_tile is None:
        target_bytes = 2 * 1024 * 1024
        row_tile = max(8, min(512, (target_bytes // (t_tile * itemsize)) // 8 * 8))
    row_tile = max(8, min(_round_up(row_tile, 8), _round_up(R, 8)))
    n_r = pl.cdiv(R, row_tile)

    # --- inputs (metadata-only reshape; NO padding, NO output slice) ---------
    x2 = jnp.reshape(x, (R, T))

    # per-row constants + per-(time-tile) halo column merged into ONE aux
    # input of shape (n_t, R, 3); tiny compared to a pass over the data.
    fpd_rows = jnp.tile(jnp.reshape(fixed_phase_diff, (n_bins,)).astype(jnp.float32), B)
    scl_rows = jnp.tile(jnp.reshape(scaling, (n_bins,)).astype(jnp.float32), B)
    halo_idx = np.minimum((np.arange(n_t) + 1) * t_tile, T - 1)     # static (n_t,)
    halo = jnp.transpose(x2[:, halo_idx]).astype(jnp.float32)       # (n_t, R)
    aux = jnp.stack([
        jnp.broadcast_to(fpd_rows[None, :], (n_t, R)),
        jnp.broadcast_to(scl_rows[None, :], (n_t, R)),
        halo,
    ], axis=-1)                                                     # (n_t, R, 3)

    out = pl.pallas_call(
        _phase_diff_kernel,
        out_shape=jax.ShapeDtypeStruct((R, Tout), out_dtype),
        grid_spec=pl.GridSpec(
            grid=(n_r, n_t),
            in_specs=[
                pl.BlockSpec((row_tile, t_tile), lambda r, t: (r, t)),
                pl.BlockSpec((1, row_tile, 3), lambda r, t: (t, r, 0)),
            ],
            out_specs=pl.BlockSpec((row_tile, t_tile), lambda r, t: (r, t)),
        ),
        compiler_params=pltpu.CompilerParams(
            dimension_semantics=("parallel", "parallel"),
            vmem_limit_bytes=vmem_limit_bytes),
    )(x2, aux)

    return out.reshape(B, n_bins, Tout)


def phase_difference_ref(x, fixed_phase_diff, scaling):
    """Pure-JAX reference mirroring the PyTorch forward."""
    pd = x[:, :, 1:] - x[:, :, :-1]
    pd = pd + fixed_phase_diff[None, :, None]
    pd = jnp.where(pd > PI, pd - 2.0 * PI, pd)
    pd = jnp.where(pd < -PI, pd + 2.0 * PI, pd)
    return pd * scaling[None, :, None]


if __name__ == "__main__":
    key = jax.random.PRNGKey(0)

    # --- test 1: module-default bins, small batch/time (ragged time edge) ---
    sr, fmin, n_bins, bins_per_octave, hop_length = 16000, 30, 256, 32, 128
    B, T = 2, 16
    fpd, scl = make_params(sr=sr, fmin=fmin, n_bins=n_bins,
                           bins_per_octave=bins_per_octave, hop_length=hop_length)
    k1, k2 = jax.random.split(key)
    x = jax.random.uniform(k1, (B, n_bins, T), dtype=jnp.float32,
                           minval=-PI, maxval=PI)
    out = jax.block_until_ready(phase_difference(x, fpd, scl))
    ref = phase_difference_ref(x, fpd, scl)
    np.testing.assert_allclose(np.asarray(out), np.asarray(ref), rtol=1e-5, atol=1e-5)

    # --- test 2: ragged rows + multiple time tiles (exercises halo path) ----
    n_bins2, B2, T2 = 40, 3, 300
    fpd2, scl2 = make_params(sr=sr, fmin=fmin, n_bins=n_bins2,
                             bins_per_octave=bins_per_octave, hop_length=hop_length)
    x2 = jax.random.uniform(k2, (B2, n_bins2, T2), dtype=jnp.float32,
                            minval=-PI, maxval=PI)
    out2 = jax.block_until_ready(
        phase_difference(x2, fpd2, scl2, row_tile=64, t_tile=128))
    ref2 = phase_difference_ref(x2, fpd2, scl2)
    np.testing.assert_allclose(np.asarray(out2), np.asarray(ref2), rtol=1e-5, atol=1e-5)

    print("KERNEL_OK")
</pallas_src>

<mosaic_0001>
module attributes {stable_mosaic.version = 11 : i64} {
  func.func @_phase_diff_kernel(%arg0: i32, %arg1: i32, %arg2: memref<512x128xf32, #tpu.memory_space<vmem>>, %arg3: memref<1x512x3xf32, #tpu.memory_space<vmem>>, %arg4: memref<512x128xf32, #tpu.memory_space<vmem>>) attributes {dimension_semantics = [#tpu.dimension_semantics<parallel>, #tpu.dimension_semantics<parallel>], iteration_bounds = array<i64: 1, 1>, scalar_prefetch = 0 : i64, scratch_operands = 0 : i64, tpu.core_type = #tpu.core_type<tc>, window_params = [{transform_indices = @transform_0, window_bounds = array<i64: 512, 128>}, {transform_indices = @transform_1, window_bounds = array<i64: 1, 512, 3>}, {transform_indices = @transform_2, window_bounds = array<i64: 512, 128>}]} {
    %c0 = arith.constant 0 : index
    %c0_0 = arith.constant 0 : index
    %0 = vector.load %arg2[%c0, %c0_0] : memref<512x128xf32, #tpu.memory_space<vmem>>, vector<512x128xf32>
    %c0_1 = arith.constant 0 : index
    %c0_2 = arith.constant 0 : index
    %c0_3 = arith.constant 0 : index
    %1 = vector.load %arg3[%c0_1, %c0_2, %c0_3] : memref<1x512x3xf32, #tpu.memory_space<vmem>>, vector<1x512x3xf32>
    %2 = vector.shape_cast %1 : vector<1x512x3xf32> to vector<512x3xf32>
    %3 = vector.extract_strided_slice %2 {offsets = [0, 0], sizes = [512, 1], strides = [1, 1]} : vector<512x3xf32> to vector<512x1xf32>
    %4 = vector.extract_strided_slice %2 {offsets = [0, 1], sizes = [512, 1], strides = [1, 1]} : vector<512x3xf32> to vector<512x1xf32>
    %5 = vector.extract_strided_slice %2 {offsets = [0, 2], sizes = [512, 1], strides = [1, 1]} : vector<512x3xf32> to vector<512x1xf32>
    %c127_i32 = arith.constant 127 : i32
    %6 = tpu.dynamic_rotate %0 by %c127_i32 dim 1 : vector<512x128xf32>, i32 -> vector<512x128xf32>
    %7 = arith.subf %6, %0 : vector<512x128xf32>
    %8 = vector.broadcast %3 : vector<512x1xf32> to vector<512x128xf32>
    %9 = arith.addf %7, %8 : vector<512x128xf32>
    %cst = arith.constant 3.14159274 : f32
    %10 = vector.broadcast %cst : f32 to vector<512x128xf32>
    %11 = arith.cmpf ogt, %9, %10 : vector<512x128xf32>
    %cst_4 = arith.constant 6.28318548 : f32
    %12 = vector.broadcast %cst_4 : f32 to vector<512x128xf32>
    %13 = arith.subf %9, %12 : vector<512x128xf32>
    %14 = arith.select %11, %13, %9 : vector<512x128xi1>, vector<512x128xf32>
    %cst_5 = arith.constant -3.14159274 : f32
    %15 = vector.broadcast %cst_5 : f32 to vector<512x128xf32>
    %16 = arith.cmpf olt, %14, %15 : vector<512x128xf32>
    %cst_6 = arith.constant 6.28318548 : f32
    %17 = vector.broadcast %cst_6 : f32 to vector<512x128xf32>
    %18 = arith.addf %14, %17 : vector<512x128xf32>
    %19 = arith.select %16, %18, %14 : vector<512x128xi1>, vector<512x128xf32>
    %20 = vector.broadcast %4 : vector<512x1xf32> to vector<512x128xf32>
    %21 = arith.mulf %19, %20 : vector<512x128xf32>
    %c0_7 = arith.constant 0 : index
    %c0_8 = arith.constant 0 : index
    %22 = vector.load %arg4[%c0_7, %c0_8] : memref<512x128xf32, #tpu.memory_space<vmem>>, vector<512x128xf32>
    tpu.vector_store %arg4[%c0_7, %c0_8], %21 {strides = array<i32>} : memref<512x128xf32, #tpu.memory_space<vmem>>, vector<512x128xf32>,
    %23 = vector.extract_strided_slice %0 {offsets = [0, 127], sizes = [512, 1], strides = [1, 1]} : vector<512x128xf32> to vector<512x1xf32>
    %24 = arith.subf %5, %23 : vector<512x1xf32>
    %25 = arith.addf %24, %3 : vector<512x1xf32>
    %cst_9 = arith.constant 3.14159274 : f32
    %26 = vector.broadcast %cst_9 : f32 to vector<512x1xf32>
    %27 = arith.cmpf ogt, %25, %26 : vector<512x1xf32>
    %cst_10 = arith.constant 6.28318548 : f32
    %28 = vector.broadcast %cst_10 : f32 to vector<512x1xf32>
    %29 = arith.subf %25, %28 : vector<512x1xf32>
    %30 = arith.select %27, %29, %25 : vector<512x1xi1>, vector<512x1xf32>
    %cst_11 = arith.constant -3.14159274 : f32
    %31 = vector.broadcast %cst_11 : f32 to vector<512x1xf32>
    %32 = arith.cmpf olt, %30, %31 : vector<512x1xf32>
    %cst_12 = arith.constant 6.28318548 : f32
    %33 = vector.broadcast %cst_12 : f32 to vector<512x1xf32>
    %34 = arith.addf %30, %33 : vector<512x1xf32>
    %35 = arith.select %32, %34, %30 : vector<512x1xi1>, vector<512x1xf32>
    %36 = arith.mulf %35, %4 : vector<512x1xf32>
    %c0_13 = arith.constant 0 : index
    %c127 = arith.constant 127 : index
    %37 = vector.load %arg4[%c0_13, %c127] : memref<512x128xf32, #tpu.memory_space<vmem>>, vector<512x1xf32>
    tpu.vector_store %arg4[%c0_13, %c127], %36 {strides = array<i32>} : memref<512x128xf32, #tpu.memory_space<vmem>>, vector<512x1xf32>,
    return
  }
  func.func @transform_0(%arg0: i32, %arg1: i32) -> (i32, i32) {
    %c0_i32 = arith.constant 0 : i32
    return %arg0, %arg1 : i32, i32
  }
  func.func @transform_1(%arg0: i32, %arg1: i32) -> (i32, i32, i32) {
    %c0_i32 = arith.constant 0 : i32
    %c0_i32_0 = arith.constant 0 : i32
    return %arg1, %arg0, %c0_i32 : i32, i32, i32
  }
  func.func @transform_2(%arg0: i32, %arg1: i32) -> (i32, i32) {
    %c0_i32 = arith.constant 0 : i32
    return %arg0, %arg1 : i32, i32
  }
}

</mosaic_0001>

<llo_original>
// kernel: tpu_custom_call.1
$region0: #{tpu_custom_call.1}
  #allocation0 [shape = 'u32[]', space=smem, size = 0x4, offset = 0x4, fixed_abs, tag = 'smem constant byte address 0x4 - core index']
  #allocation1 [shape = 'u32[144,128]{1,0:T(1,128)}', space=vmem, size = 0x12000, scoped, tag = 'internal scratch']
  %s0 = inlined_call_operand.vmem [shape: f32[512,16], index: 0, kind: input, shape index: {}]
  %s1 = inlined_call_operand.vmem [shape: f32[1,512,3], index: 1, kind: input, shape index: {}]
  %s2 = inlined_call_operand.vmem [shape: f32[512,15], index: 2, kind: output, shape index: {}]
  %s3 = sld [smem:[#allocation0]]
  $region18: #{tpu_custom_call.1} parent=0
    _
  %s5 = ssub.s32 1, %s3
  %s6 = scalar_select 0, %s5, %s3
  // Predicated region
  $region2: #{tpu_custom_call.1} parent=0 // pred_check
    _
  $region3: #{tpu_custom_call.1} parent=0 // pred_check_branch
    %8 = sbr.rel (0) target = $region5
  $region4: #{tpu_custom_call.1} parent=0 // pred_region
    _
  $region5: #{tpu_custom_call.1} parent=0 // pred_fallthru
    _
  // Predicated region
  $region6: #{tpu_custom_call.1} parent=0 // pred_check
    _
  $region7: #{tpu_custom_call.1} parent=0 // pred_check_branch
    %10 = sbr.rel (0) target = $region9
  $region8: #{tpu_custom_call.1} parent=0 // pred_region
    _
  $region9: #{tpu_custom_call.1} parent=0 // pred_fallthru
    _
  %v11 = vld [vmem:[%s0] sm:$0xff]
  %v12 = vld [vmem:[%s0 + $0x8] sm:$0xff]
  %v13 = vld [vmem:[%s0 + $0x10] sm:$0xff]
  %v14 = vld [vmem:[%s0 + $0x18] sm:$0xff]
  %v15 = vld [vmem:[%s0 + $0x20] sm:$0xff]
  %v16 = vld [vmem:[%s0 + $0x28] sm:$0xff]
  %v17 = vld [vmem:[%s0 + $0x30] sm:$0xff]
  %v18 = vld [vmem:[%s0 + $0x38] sm:$0xff]
  %v19 = vld [vmem:[%s0 + $0x40] sm:$0xff]
  %v20 = vld [vmem:[%s0 + $0x48] sm:$0xff]
  %v21 = vld [vmem:[%s0 + $0x50] sm:$0xff]
  %v22 = vld [vmem:[%s0 + $0x58] sm:$0xff]
  %v23 = vld [vmem:[%s0 + $0x60] sm:$0xff]
  %v24 = vld [vmem:[%s0 + $0x68] sm:$0xff]
  %v25 = vld [vmem:[%s0 + $0x70] sm:$0xff]
  %v26 = vld [vmem:[%s0 + $0x78] sm:$0xff]
  %v27 = vld [vmem:[%s0 + $0x80] sm:$0xff]
  %v28 = vld [vmem:[%s0 + $0x88] sm:$0xff]
  %v29 = vld [vmem:[%s0 + $0x90] sm:$0xff]
  %v30 = vld [vmem:[%s0 + $0x98] sm:$0xff]
  %v31 = vld [vmem:[%s0 + $0xa0] sm:$0xff]
  %v32 = vld [vmem:[%s0 + $0xa8] sm:$0xff]
  %v33 = vld [vmem:[%s0 + $0xb0] sm:$0xff]
  %v34 = vld [vmem:[%s0 + $0xb8] sm:$0xff]
  %v35 = vld [vmem:[%s0 + $0xc0] sm:$0xff]
  %v36 = vld [vmem:[%s0 + $0xc8] sm:$0xff]
  %v37 = vld [vmem:[%s0 + $0xd0] sm:$0xff]
  %v38 = vld [vmem:[%s0 + $0xd8] sm:$0xff]
  %v39 = vld [vmem:[%s0 + $0xe0] sm:$0xff]
  %v40 = vld [vmem:[%s0 + $0xe8] sm:$0xff]
  %v41 = vld [vmem:[%s0 + $0xf0] sm:$0xff]
  %v42 = vld [vmem:[%s0 + $0xf8] sm:$0xff]
  %v43 = vld [vmem:[%s0 + $0x100] sm:$0xff]
  %v44 = vld [vmem:[%s0 + $0x108] sm:$0xff]
  %v45 = vld [vmem:[%s0 + $0x110] sm:$0xff]
  %v46 = vld [vmem:[%s0 + $0x118] sm:$0xff]
  %v47 = vld [vmem:[%s0 + $0x120] sm:$0xff]
  %v48 = vld [vmem:[%s0 + $0x128] sm:$0xff]
  %v49 = vld [vmem:[%s0 + $0x130] sm:$0xff]
  %v50 = vld [vmem:[%s0 + $0x138] sm:$0xff]
  %v51 = vld [vmem:[%s0 + $0x140] sm:$0xff]
  %v52 = vld [vmem:[%s0 + $0x148] sm:$0xff]
  %v53 = vld [vmem:[%s0 + $0x150] sm:$0xff]
  %v54 = vld [vmem:[%s0 + $0x158] sm:$0xff]
  %v55 = vld [vmem:[%s0 + $0x160] sm:$0xff]
  %v56 = vld [vmem:[%s0 + $0x168] sm:$0xff]
  %v57 = vld [vmem:[%s0 + $0x170] sm:$0xff]
  %v58 = vld [vmem:[%s0 + $0x178] sm:$0xff]
  %v59 = vld [vmem:[%s0 + $0x180] sm:$0xff]
  %v60 = vld [vmem:[%s0 + $0x188] sm:$0xff]
  %v61 = vld [vmem:[%s0 + $0x190] sm:$0xff]
  %v62 = vld [vmem:[%s0 + $0x198] sm:$0xff]
  %v63 = vld [vmem:[%s0 + $0x1a0] sm:$0xff]
  %v64 = vld [vmem:[%s0 + $0x1a8] sm:$0xff]
  %v65 = vld [vmem:[%s0 + $0x1b0] sm:$0xff]
  %v66 = vld [vmem:[%s0 + $0x1b8] sm:$0xff]
  %v67 = vld [vmem:[%s0 + $0x1c0] sm:$0xff]
  %v68 = vld [vmem:[%s0 + $0x1c8] sm:$0xff]
  %v69 = vld [vmem:[%s0 + $0x1d0] sm:$0xff]
  %v70 = vld [vmem:[%s0 + $0x1d8] sm:$0xff]
  %v71 = vld [vmem:[%s0 + $0x1e0] sm:$0xff]
  %v72 = vld [vmem:[%s0 + $0x1e8] sm:$0xff]
  %v73 = vld [vmem:[%s0 + $0x1f0] sm:$0xff]
  %v74 = vld [vmem:[%s0 + $0x1f8] sm:$0xff]
  %v75 = vld [vmem:[%s1] sm:$0xff]
  %v76 = vld [vmem:[%s1 + $0x8] sm:$0xff]
  %v77 = vld [vmem:[%s1 + $0x10] sm:$0xff]
  %v78 = vld [vmem:[%s1 + $0x18] sm:$0xff]
  %v79 = vld [vmem:[%s1 + $0x20] sm:$0xff]
  %v80 = vld [vmem:[%s1 + $0x28] sm:$0xff]
  %v81 = vld [vmem:[%s1 + $0x30] sm:$0xff]
  %v82 = vld [vmem:[%s1 + $0x38] sm:$0xff]
  %v83 = vld [vmem:[%s1 + $0x40] sm:$0xff]
  %v84 = vld [vmem:[%s1 + $0x48] sm:$0xff]
  %v85 = vld [vmem:[%s1 + $0x50] sm:$0xff]
  %v86 = vld [vmem:[%s1 + $0x58] sm:$0xff]
  %v87 = vld [vmem:[%s1 + $0x60] sm:$0xff]
  %v88 = vld [vmem:[%s1 + $0x68] sm:$0xff]
  %v89 = vld [vmem:[%s1 + $0x70] sm:$0xff]
  %v90 = vld [vmem:[%s1 + $0x78] sm:$0xff]
  %v91 = vld [vmem:[%s1 + $0x80] sm:$0xff]
  %v92 = vld [vmem:[%s1 + $0x88] sm:$0xff]
  %v93 = vld [vmem:[%s1 + $0x90] sm:$0xff]
  %v94 = vld [vmem:[%s1 + $0x98] sm:$0xff]
  %v95 = vld [vmem:[%s1 + $0xa0] sm:$0xff]
  %v96 = vld [vmem:[%s1 + $0xa8] sm:$0xff]
  %v97 = vld [vmem:[%s1 + $0xb0] sm:$0xff]
  %v98 = vld [vmem:[%s1 + $0xb8] sm:$0xff]
  %v99 = vld [vmem:[%s1 + $0xc0] sm:$0xff]
  %v100 = vld [vmem:[%s1 + $0xc8] sm:$0xff]
  %v101 = vld [vmem:[%s1 + $0xd0] sm:$0xff]
  %v102 = vld [vmem:[%s1 + $0xd8] sm:$0xff]
  %v103 = vld [vmem:[%s1 + $0xe0] sm:$0xff]
  %v104 = vld [vmem:[%s1 + $0xe8] sm:$0xff]
  %v105 = vld [vmem:[%s1 + $0xf0] sm:$0xff]
  %v106 = vld [vmem:[%s1 + $0xf8] sm:$0xff]
  %v107 = vld [vmem:[%s1 + $0x100] sm:$0xff]
  %v108 = vld [vmem:[%s1 + $0x108] sm:$0xff]
  %v109 = vld [vmem:[%s1 + $0x110] sm:$0xff]
  %v110 = vld [vmem:[%s1 + $0x118] sm:$0xff]
  %v111 = vld [vmem:[%s1 + $0x120] sm:$0xff]
  %v112 = vld [vmem:[%s1 + $0x128] sm:$0xff]
  %v113 = vld [vmem:[%s1 + $0x130] sm:$0xff]
  %v114 = vld [vmem:[%s1 + $0x138] sm:$0xff]
  %v115 = vld [vmem:[%s1 + $0x140] sm:$0xff]
  %v116 = vld [vmem:[%s1 + $0x148] sm:$0xff]
  %v117 = vld [vmem:[%s1 + $0x150] sm:$0xff]
  %v118 = vld [vmem:[%s1 + $0x158] sm:$0xff]
  %v119 = vld [vmem:[%s1 + $0x160] sm:$0xff]
  %v120 = vld [vmem:[%s1 + $0x168] sm:$0xff]
  %v121 = vld [vmem:[%s1 + $0x170] sm:$0xff]
  %v122 = vld [vmem:[%s1 + $0x178] sm:$0xff]
  %v123 = vld [vmem:[%s1 + $0x180] sm:$0xff]
  %v124 = vld [vmem:[%s1 + $0x188] sm:$0xff]
  %v125 = vld [vmem:[%s1 + $0x190] sm:$0xff]
  %v126 = vld [vmem:[%s1 + $0x198] sm:$0xff]
  %v127 = vld [vmem:[%s1 + $0x1a0] sm:$0xff]
  %v128 = vld [vmem:[%s1 + $0x1a8] sm:$0xff]
  %v129 = vld [vmem:[%s1 + $0x1b0] sm:$0xff]
  %v130 = vld [vmem:[%s1 + $0x1b8] sm:$0xff]
  %v131 = vld [vmem:[%s1 + $0x1c0] sm:$0xff]
  %v132 = vld [vmem:[%s1 + $0x1c8] sm:$0xff]
  %v133 = vld [vmem:[%s1 + $0x1d0] sm:$0xff]
  %v134 = vld [vmem:[%s1 + $0x1d8] sm:$0xff]
  %v135 = vld [vmem:[%s1 + $0x1e0] sm:$0xff]
  %v136 = vld [vmem:[%s1 + $0x1e8] sm:$0xff]
  %v137 = vld [vmem:[%s1 + $0x1f0] sm:$0xff]
  %v138 = vld [vmem:[%s1 + $0x1f8] sm:$0xff]
  %139 = vrot.lane.b32.xlu0 %v11, 127
  %v140 = vpop.permute.xlu0 %139
  %141 = vrot.lane.b32.xlu0 %v12, 127
  %v142 = vpop.permute.xlu0 %141
  %143 = vrot.lane.b32.xlu0 %v13, 127
  %v144 = vpop.permute.xlu0 %143
  %145 = vrot.lane.b32.xlu0 %v14, 127
  %v146 = vpop.permute.xlu0 %145
  %147 = vrot.lane.b32.xlu0 %v15, 127
  %v148 = vpop.permute.xlu0 %147
  %149 = vrot.lane.b32.xlu0 %v16, 127
  %v150 = vpop.permute.xlu0 %149
  %151 = vrot.lane.b32.xlu0 %v17, 127
  %v152 = vpop.permute.xlu0 %151
  %153 = vrot.lane.b32.xlu0 %v18, 127
  %v154 = vpop.permute.xlu0 %153
  %155 = vrot.lane.b32.xlu0 %v19, 127
  %v156 = vpop.permute.xlu0 %155
  %157 = vrot.lane.b32.xlu0 %v20, 127
  %v158 = vpop.permute.xlu0 %157
  %159 = vrot.lane.b32.xlu0 %v21, 127
  %v160 = vpop.permute.xlu0 %159
  %161 = vrot.lane.b32.xlu0 %v22, 127
  %v162 = vpop.permute.xlu0 %161
  %163 = vrot.lane.b32.xlu0 %v23, 127
  %v164 = vpop.permute.xlu0 %163
  %165 = vrot.lane.b32.xlu0 %v24, 127
  %v166 = vpop.permute.xlu0 %165
  %167 = vrot.lane.b32.xlu0 %v25, 127
  %v168 = vpop.permute.xlu0 %167
  %169 = vrot.lane.b32.xlu0 %v26, 127
  %v170 = vpop.permute.xlu0 %169
  %171 = vrot.lane.b32.xlu0 %v27, 127
  %v172 = vpop.permute.xlu0 %171
  %173 = vrot.lane.b32.xlu0 %v28, 127
  %v174 = vpop.permute.xlu0 %173
  %175 = vrot.lane.b32.xlu0 %v29, 127
  %v176 = vpop.permute.xlu0 %175
  %177 = vrot.lane.b32.xlu0 %v30, 127
  %v178 = vpop.permute.xlu0 %177
  %179 = vrot.lane.b32.xlu0 %v31, 127
  %v180 = vpop.permute.xlu0 %179
  %181 = vrot.lane.b32.xlu0 %v32, 127
  %v182 = vpop.permute.xlu0 %181
  %183 = vrot.lane.b32.xlu0 %v33, 127
  %v184 = vpop.permute.xlu0 %183
  %185 = vrot.lane.b32.xlu0 %v34, 127
  %v186 = vpop.permute.xlu0 %185
  %187 = vrot.lane.b32.xlu0 %v35, 127
  %v188 = vpop.permute.xlu0 %187
  %189 = vrot.lane.b32.xlu0 %v36, 127
  %v190 = vpop.permute.xlu0 %189
  %191 = vrot.lane.b32.xlu0 %v37, 127
  %v192 = vpop.permute.xlu0 %191
  %193 = vrot.lane.b32.xlu0 %v38, 127
  %v194 = vpop.permute.xlu0 %193
  %195 = vrot.lane.b32.xlu0 %v39, 127
  %v196 = vpop.permute.xlu0 %195
  %197 = vrot.lane.b32.xlu0 %v40, 127
  %v198 = vpop.permute.xlu0 %197
  %199 = vrot.lane.b32.xlu0 %v41, 127
  %v200 = vpop.permute.xlu0 %199
  %201 = vrot.lane.b32.xlu0 %v42, 127
  %v202 = vpop.permute.xlu0 %201
  %203 = vrot.lane.b32.xlu0 %v43, 127
  %v204 = vpop.permute.xlu0 %203
  %205 = vrot.lane.b32.xlu0 %v44, 127
  %v206 = vpop.permute.xlu0 %205
  %207 = vrot.lane.b32.xlu0 %v45, 127
  %v208 = vpop.permute.xlu0 %207
  %209 = vrot.lane.b32.xlu0 %v46, 127
  %v210 = vpop.permute.xlu0 %209
  %211 = vrot.lane.b32.xlu0 %v47, 127
  %v212 = vpop.permute.xlu0 %211
  %213 = vrot.lane.b32.xlu0 %v48, 127
  %v214 = vpop.permute.xlu0 %213
  %215 = vrot.lane.b32.xlu0 %v49, 127
  %v216 = vpop.permute.xlu0 %215
  %217 = vrot.lane.b32.xlu0 %v50, 127
  %v218 = vpop.permute.xlu0 %217
  %219 = vrot.lane.b32.xlu0 %v51, 127
  %v220 = vpop.permute.xlu0 %219
  %221 = vrot.lane.b32.xlu0 %v52, 127
  %v222 = vpop.permute.xlu0 %221
  %223 = vrot.lane.b32.xlu0 %v53, 127
  %v224 = vpop.permute.xlu0 %223
  %225 = vrot.lane.b32.xlu0 %v54, 127
  %v226 = vpop.permute.xlu0 %225
  %227 = vrot.lane.b32.xlu0 %v55, 127
  %v228 = vpop.permute.xlu0 %227
  %229 = vrot.lane.b32.xlu0 %v56, 127
  %v230 = vpop.permute.xlu0 %229
  %231 = vrot.lane.b32.xlu0 %v57, 127
  %v232 = vpop.permute.xlu0 %231
  %233 = vrot.lane.b32.xlu0 %v58, 127
  %v234 = vpop.permute.xlu0 %233
  %235 = vrot.lane.b32.xlu0 %v59, 127
  %v236 = vpop.permute.xlu0 %235
  %237 = vrot.lane.b32.xlu0 %v60, 127
  %v238 = vpop.permute.xlu0 %237
  %239 = vrot.lane.b32.xlu0 %v61, 127
  %v240 = vpop.permute.xlu0 %239
  %241 = vrot.lane.b32.xlu0 %v62, 127
  %v242 = vpop.permute.xlu0 %241
  %243 = vrot.lane.b32.xlu0 %v63, 127
  %v244 = vpop.permute.xlu0 %243
  %245 = vrot.lane.b32.xlu0 %v64, 127
  %v246 = vpop.permute.xlu0 %245
  %247 = vrot.lane.b32.xlu0 %v65, 127
  %v248 = vpop.permute.xlu0 %247
  %249 = vrot.lane.b32.xlu0 %v66, 127
  %v250 = vpop.permute.xlu0 %249
  %251 = vrot.lane.b32.xlu0 %v67, 127
  %v252 = vpop.permute.xlu0 %251
  %253 = vrot.lane.b32.xlu0 %v68, 127
  %v254 = vpop.permute.xlu0 %253
  %255 = vrot.lane.b32.xlu0 %v69, 127
  %v256 = vpop.permute.xlu0 %255
  %257 = vrot.lane.b32.xlu0 %v70, 127
  %v258 = vpop.permute.xlu0 %257
  %259 = vrot.lane.b32.xlu0 %v71, 127
  %v260 = vpop.permute.xlu0 %259
  %261 = vrot.lane.b32.xlu0 %v72, 127
  %v262 = vpop.permute.xlu0 %261
  %263 = vrot.lane.b32.xlu0 %v73, 127
  %v264 = vpop.permute.xlu0 %263
  %265 = vrot.lane.b32.xlu0 %v74, 127
  %v266 = vpop.permute.xlu0 %265
  %v267 = vsub.f32 %v140, %v11
  %v268 = vsub.f32 %v142, %v12
  %v269 = vsub.f32 %v144, %v13
  %v270 = vsub.f32 %v146, %v14
  %v271 = vsub.f32 %v148, %v15
  %v272 = vsub.f32 %v150, %v16
  %v273 = vsub.f32 %v152, %v17
  %v274 = vsub.f32 %v154, %v18
  %v275 = vsub.f32 %v156, %v19
  %v276 = vsub.f32 %v158, %v20
  %v277 = vsub.f32 %v160, %v21
  %v278 = vsub.f32 %v162, %v22
  %v279 = vsub.f32 %v164, %v23
  %v280 = vsub.f32 %v166, %v24
  %v281 = vsub.f32 %v168, %v25
  %v282 = vsub.f32 %v170, %v26
  %v283 = vsub.f32 %v172, %v27
  %v284 = vsub.f32 %v174, %v28
  %v285 = vsub.f32 %v176, %v29
  %v286 = vsub.f32 %v178, %v30
  %v287 = vsub.f32 %v180, %v31
  %v288 = vsub.f32 %v182, %v32
  %v289 = vsub.f32 %v184, %v33
  %v290 = vsub.f32 %v186, %v34
  %v291 = vsub.f32 %v188, %v35
  %v292 = vsub.f32 %v190, %v36
  %v293 = vsub.f32 %v192, %v37
  %v294 = vsub.f32 %v194, %v38
  %v295 = vsub.f32 %v196, %v39
  %v296 = vsub.f32 %v198, %v40
  %v297 = vsub.f32 %v200, %v41
  %v298 = vsub.f32 %v202, %v42
  %v299 = vsub.f32 %v204, %v43
  %v300 = vsub.f32 %v206, %v44
  %v301 = vsub.f32 %v208, %v45
  %v302 = vsub.f32 %v210, %v46
  %v303 = vsub.f32 %v212, %v47
  %v304 = vsub.f32 %v214, %v48
  %v305 = vsub.f32 %v216, %v49
  %v306 = vsub.f32 %v218, %v50
  %v307 = vsub.f32 %v220, %v51
  %v308 = vsub.f32 %v222, %v52
  %v309 = vsub.f32 %v224, %v53
  %v310 = vsub.f32 %v226, %v54
  %v311 = vsub.f32 %v228, %v55
  %v312 = vsub.f32 %v230, %v56
  %v313 = vsub.f32 %v232, %v57
  %v314 = vsub.f32 %v234, %v58
  %v315 = vsub.f32 %v236, %v59
  %v316 = vsub.f32 %v238, %v60
  %v317 = vsub.f32 %v240, %v61
  %v318 = vsub.f32 %v242, %v62
  %v319 = vsub.f32 %v244, %v63
  %v320 = vsub.f32 %v246, %v64
  %v321 = vsub.f32 %v248, %v65
  %v322 = vsub.f32 %v250, %v66
  %v323 = vsub.f32 %v252, %v67
  %v324 = vsub.f32 %v254, %v68
  %v325 = vsub.f32 %v256, %v69
  %v326 = vsub.f32 %v258, %v70
  %v327 = vsub.f32 %v260, %v71
  %v328 = vsub.f32 %v262, %v72
  %v329 = vsub.f32 %v264, %v73
  %v330 = vsub.f32 %v266, %v74
  %332 = vset.pattern.permute.xlu0 0
  %333 = vperm.xlu0 %332, %v75
  %v334 = vpop.permute.xlu0 %333
  %337 = vset.pattern.permute.xlu0 0
  %338 = vperm.xlu0 %337, %v76
  %v339 = vpop.permute.xlu0 %338
  %342 = vset.pattern.permute.xlu0 0
  %343 = vperm.xlu0 %342, %v77
  %v344 = vpop.permute.xlu0 %343
  %347 = vset.pattern.permute.xlu0 0
  %348 = vperm.xlu0 %347, %v78
  %v349 = vpop.permute.xlu0 %348
  %352 = vset.pattern.permute.xlu0 0
  %353 = vperm.xlu0 %352, %v79
  %v354 = vpop.permute.xlu0 %353
  %357 = vset.pattern.permute.xlu0 0
  %358 = vperm.xlu0 %357, %v80
  %v359 = vpop.permute.xlu0 %358
  %362 = vset.pattern.permute.xlu0 0
  %363 = vperm.xlu0 %362, %v81
  %v364 = vpop.permute.xlu0 %363
  %367 = vset.pattern.permute.xlu0 0
  %368 = vperm.xlu0 %367, %v82
  %v369 = vpop.permute.xlu0 %368
  %372 = vset.pattern.permute.xlu0 0
  %373 = vperm.xlu0 %372, %v83
  %v374 = vpop.permute.xlu0 %373
  %377 = vset.pattern.permute.xlu0 0
  %378 = vperm.xlu0 %377, %v84
  %v379 = vpop.permute.xlu0 %378
  %382 = vset.pattern.permute.xlu0 0
  %383 = vperm.xlu0 %382, %v85
  %v384 = vpop.permute.xlu0 %383
  %387 = vset.pattern.permute.xlu0 0
  %388 = vperm.xlu0 %387, %v86
  %v389 = vpop.permute.xlu0 %388
  %392 = vset.pattern.permute.xlu0 0
  %393 = vperm.xlu0 %392, %v87
  %v394 = vpop.permute.xlu0 %393
  %397 = vset.pattern.permute.xlu0 0
  %398 = vperm.xlu0 %397, %v88
  %v399 = vpop.permute.xlu0 %398
  %402 = vset.pattern.permute.xlu0 0
  %403 = vperm.xlu0 %402, %v89
  %v404 = vpop.permute.xlu0 %403
  %407 = vset.pattern.permute.xlu0 0
  %408 = vperm.xlu0 %407, %v90
  %v409 = vpop.permute.xlu0 %408
  %412 = vset.pattern.permute.xlu0 0
  %413 = vperm.xlu0 %412, %v91
  %v414 = vpop.permute.xlu0 %413
  %417 = vset.pattern.permute.xlu0 0
  %418 = vperm.xlu0 %417, %v92
  %v419 = vpop.permute.xlu0 %418
  %422 = vset.pattern.permute.xlu0 0
  %423 = vperm.xlu0 %422, %v93
  %v424 = vpop.permute.xlu0 %423
  %427 = vset.pattern.permute.xlu0 0
  %428 = vperm.xlu0 %427, %v94
  %v429 = vpop.permute.xlu0 %428
  %432 = vset.pattern.permute.xlu0 0
  %433 = vperm.xlu0 %432, %v95
  %v434 = vpop.permute.xlu0 %433
  %437 = vset.pattern.permute.xlu0 0
  %438 = vperm.xlu0 %437, %v96
  %v439 = vpop.permute.xlu0 %438
  %442 = vset.pattern.permute.xlu0 0
  %443 = vperm.xlu0 %442, %v97
  %v444 = vpop.permute.xlu0 %443
  %447 = vset.pattern.permute.xlu0 0
  %448 = vperm.xlu0 %447, %v98
  %v449 = vpop.permute.xlu0 %448
  %452 = vset.pattern.permute.xlu0 0
  %453 = vperm.xlu0 %452, %v99
  %v454 = vpop.permute.xlu0 %453
  %457 = vset.pattern.permute.xlu0 0
  %458 = vperm.xlu0 %457, %v100
  %v459 = vpop.permute.xlu0 %458
  %462 = vset.pattern.permute.xlu0 0
  %463 = vperm.xlu0 %462, %v101
  %v464 = vpop.permute.xlu0 %463
  %467 = vset.pattern.permute.xlu0 0
  %468 = vperm.xlu0 %467, %v102
  %v469 = vpop.permute.xlu0 %468
  %472 = vset.pattern.permute.xlu0 0
  %473 = vperm.xlu0 %472, %v103
  %v474 = vpop.permute.xlu0 %473
  %477 = vset.pattern.permute.xlu0 0
  %478 = vperm.xlu0 %477, %v104
  %v479 = vpop.permute.xlu0 %478
  %482 = vset.pattern.permute.xlu0 0
  %483 = vperm.xlu0 %482, %v105
  %v484 = vpop.permute.xlu0 %483
  %487 = vset.pattern.permute.xlu0 0
  %488 = vperm.xlu0 %487, %v106
  %v489 = vpop.permute.xlu0 %488
  %492 = vset.pattern.permute.xlu0 0
  %493 = vperm.xlu0 %492, %v107
  %v494 = vpop.permute.xlu0 %493
  %497 = vset.pattern.permute.xlu0 0
  %498 = vperm.xlu0 %497, %v108
  %v499 = vpop.permute.xlu0 %498
  %502 = vset.pattern.permute.xlu0 0
  %503 = vperm.xlu0 %502, %v109
  %v504 = vpop.permute.xlu0 %503
  %507 = vset.pattern.permute.xlu0 0
  %508 = vperm.xlu0 %507, %v110
  %v509 = vpop.permute.xlu0 %508
  %512 = vset.pattern.permute.xlu0 0
  %513 = vperm.xlu0 %512, %v111
  %v514 = vpop.permute.xlu0 %513
  %517 = vset.pattern.permute.xlu0 0
  %518 = vperm.xlu0 %517, %v112
  %v519 = vpop.permute.xlu0 %518
  %522 = vset.pattern.permute.xlu0 0
  %523 = vperm.xlu0 %522, %v113
  %v524 = vpop.permute.xlu0 %523
  %527 = vset.pattern.permute.xlu0 0
  %528 = vperm.xlu0 %527, %v114
  %v529 = vpop.permute.xlu0 %528
  %532 = vset.pattern.permute.xlu0 0
  %533 = vperm.xlu0 %532, %v115
  %v534 = vpop.permute.xlu0 %533
  %537 = vset.pattern.permute.xlu0 0
  %538 = vperm.xlu0 %537, %v116
  %v539 = vpop.permute.xlu0 %538
  %542 = vset.pattern.permute.xlu0 0
  %543 = vperm.xlu0 %542, %v117
  %v544 = vpop.permute.xlu0 %543
  %547 = vset.pattern.permute.xlu0 0
  %548 = vperm.xlu0 %547, %v118
  %v549 = vpop.permute.xlu0 %548
  %552 = vset.pattern.permute.xlu0 0
  %553 = vperm.xlu0 %552, %v119
  %v554 = vpop.permute.xlu0 %553
  %557 = vset.pattern.permute.xlu0 0
  %558 = vperm.xlu0 %557, %v120
  %v559 = vpop.permute.xlu0 %558
  %562 = vset.pattern.permute.xlu0 0
  %563 = vperm.xlu0 %562, %v121
  %v564 = vpop.permute.xlu0 %563
  %567 = vset.pattern.permute.xlu0 0
  %568 = vperm.xlu0 %567, %v122
  %v569 = vpop.permute.xlu0 %568
  %572 = vset.pattern.permute.xlu0 0
  %573 = vperm.xlu0 %572, %v123
  %v574 = vpop.permute.xlu0 %573
  %577 = vset.pattern.permute.xlu0 0
  %578 = vperm.xlu0 %577, %v124
  %v579 = vpop.permute.xlu0 %578
  %582 = vset.pattern.permute.xlu0 0
  %583 = vperm.xlu0 %582, %v125
  %v584 = vpop.permute.xlu0 %583
  %587 = vset.pattern.permute.xlu0 0
  %588 = vperm.xlu0 %587, %v126
  %v589 = vpop.permute.xlu0 %588
  %592 = vset.pattern.permute.xlu0 0
  %593 = vperm.xlu0 %592, %v127
  %v594 = vpop.permute.xlu0 %593
  %597 = vset.pattern.permute.xlu0 0
  %598 = vperm.xlu0 %597, %v128
  %v599 = vpop.permute.xlu0 %598
  %602 = vset.pattern.permute.xlu0 0
  %603 = vperm.xlu0 %602, %v129
  %v604 = vpop.permute.xlu0 %603
  %607 = vset.pattern.permute.xlu0 0
  %608 = vperm.xlu0 %607, %v130
  %v609 = vpop.permute.xlu0 %608
  %612 = vset.pattern.permute.xlu0 0
  %613 = vperm.xlu0 %612, %v131
  %v614 = vpop.permute.xlu0 %613
  %617 = vset.pattern.permute.xlu0 0
  %618 = vperm.xlu0 %617, %v132
  %v619 = vpop.permute.xlu0 %618
  %622 = vset.pattern.permute.xlu0 0
  %623 = vperm.xlu0 %622, %v133
  %v624 = vpop.permute.xlu0 %623
  %627 = vset.pattern.permute.xlu0 0
  %628 = vperm.xlu0 %627, %v134
  %v629 = vpop.permute.xlu0 %628
  %632 = vset.pattern.permute.xlu0 0
  %633 = vperm.xlu0 %632, %v135
  %v634 = vpop.permute.xlu0 %633
  %637 = vset.pattern.permute.xlu0 0
  %638 = vperm.xlu0 %637, %v136
  %v639 = vpop.permute.xlu0 %638
  %642 = vset.pattern.permute.xlu0 0
  %643 = vperm.xlu0 %642, %v137
  %v644 = vpop.permute.xlu0 %643
  %647 = vset.pattern.permute.xlu0 0
  %648 = vperm.xlu0 %647, %v138
  %v649 = vpop.permute.xlu0 %648
  %v651 = vadd.f32 %v267, %v334
  %v652 = vadd.f32 %v268, %v339
  %v653 = vadd.f32 %v269, %v344
  %v654 = vadd.f32 %v270, %v349
  %v655 = vadd.f32 %v271, %v354
  %v656 = vadd.f32 %v272, %v359
  %v657 = vadd.f32 %v273, %v364
  %v658 = vadd.f32 %v274, %v369
  %v659 = vadd.f32 %v275, %v374
  %v660 = vadd.f32 %v276, %v379
  %v661 = vadd.f32 %v277, %v384
  %v662 = vadd.f32 %v278, %v389
  %v663 = vadd.f32 %v279, %v394
  %v664 = vadd.f32 %v280, %v399
  %v665 = vadd.f32 %v281, %v404
  %v666 = vadd.f32 %v282, %v409
  %v667 = vadd.f32 %v283, %v414
  %v668 = vadd.f32 %v284, %v419
  %v669 = vadd.f32 %v285, %v424
  %v670 = vadd.f32 %v286, %v429
  %v671 = vadd.f32 %v287, %v434
  %v672 = vadd.f32 %v288, %v439
  %v673 = vadd.f32 %v289, %v444
  %v674 = vadd.f32 %v290, %v449
  %v675 = vadd.f32 %v291, %v454
  %v676 = vadd.f32 %v292, %v459
  %v677 = vadd.f32 %v293, %v464
  %v678 = vadd.f32 %v294, %v469
  %v679 = vadd.f32 %v295, %v474
  %v680 = vadd.f32 %v296, %v479
  %v681 = vadd.f32 %v297, %v484
  %v682 = vadd.f32 %v298, %v489
  %v683 = vadd.f32 %v299, %v494
  %v684 = vadd.f32 %v300, %v499
  %v685 = vadd.f32 %v301, %v504
  %v686 = vadd.f32 %v302, %v509
  %v687 = vadd.f32 %v303, %v514
  %v688 = vadd.f32 %v304, %v519
  %v689 = vadd.f32 %v305, %v524
  %v690 = vadd.f32 %v306, %v529
  %v691 = vadd.f32 %v307, %v534
  %v692 = vadd.f32 %v308, %v539
  %v693 = vadd.f32 %v309, %v544
  %v694 = vadd.f32 %v310, %v549
  %v695 = vadd.f32 %v311, %v554
  %v696 = vadd.f32 %v312, %v559
  %v697 = vadd.f32 %v313, %v564
  %v698 = vadd.f32 %v314, %v569
  %v699 = vadd.f32 %v315, %v574
  %v700 = vadd.f32 %v316, %v579
  %v701 = vadd.f32 %v317, %v584
  %v702 = vadd.f32 %v318, %v589
  %v703 = vadd.f32 %v319, %v594
  %v704 = vadd.f32 %v320, %v599
  %v705 = vadd.f32 %v321, %v604
  %v706 = vadd.f32 %v322, %v609
  %v707 = vadd.f32 %v323, %v614
  %v708 = vadd.f32 %v324, %v619
  %v709 = vadd.f32 %v325, %v624
  %v710 = vadd.f32 %v326, %v629
  %v711 = vadd.f32 %v327, %v634
  %v712 = vadd.f32 %v328, %v639
  %v713 = vadd.f32 %v329, %v644
  %v714 = vadd.f32 %v330, %v649
  %vm715 = vcmp.gt.f32.partialorder %v651, 3.1415927
  %vm716 = vcmp.gt.f32.partialorder %v652, 3.1415927
  %vm717 = vcmp.gt.f32.partialorder %v653, 3.1415927
  %vm718 = vcmp.gt.f32.partialorder %v654, 3.1415927
  %vm719 = vcmp.gt.f32.partialorder %v655, 3.1415927
  %vm720 = vcmp.gt.f32.partialorder %v656, 3.1415927
  %vm721 = vcmp.gt.f32.partialorder %v657, 3.1415927
  %vm722 = vcmp.gt.f32.partialorder %v658, 3.1415927
  %vm723 = vcmp.gt.f32.partialorder %v659, 3.1415927
  %vm724 = vcmp.gt.f32.partialorder %v660, 3.1415927
  %vm725 = vcmp.gt.f32.partialorder %v661, 3.1415927
  %vm726 = vcmp.gt.f32.partialorder %v662, 3.1415927
  %vm727 = vcmp.gt.f32.partialorder %v663, 3.1415927
  %vm728 = vcmp.gt.f32.partialorder %v664, 3.1415927
  %vm729 = vcmp.gt.f32.partialorder %v665, 3.1415927
  %vm730 = vcmp.gt.f32.partialorder %v666, 3.1415927
  %vm731 = vcmp.gt.f32.partialorder %v667, 3.1415927
  %vm732 = vcmp.gt.f32.partialorder %v668, 3.1415927
  %vm733 = vcmp.gt.f32.partialorder %v669, 3.1415927
  %vm734 = vcmp.gt.f32.partialorder %v670, 3.1415927
  %vm735 = vcmp.gt.f32.partialorder %v671, 3.1415927
  %vm736 = vcmp.gt.f32.partialorder %v672, 3.1415927
  %vm737 = vcmp.gt.f32.partialorder %v673, 3.1415927
  %vm738 = vcmp.gt.f32.partialorder %v674, 3.1415927
  %vm739 = vcmp.gt.f32.partialorder %v675, 3.1415927
  %vm740 = vcmp.gt.f32.partialorder %v676, 3.1415927
  %vm741 = vcmp.gt.f32.partialorder %v677, 3.1415927
  %vm742 = vcmp.gt.f32.partialorder %v678, 3.1415927
  %vm743 = vcmp.gt.f32.partialorder %v679, 3.1415927
  %vm744 = vcmp.gt.f32.partialorder %v680, 3.1415927
  %vm745 = vcmp.gt.f32.partialorder %v681, 3.1415927
  %vm746 = vcmp.gt.f32.partialorder %v682, 3.1415927
  %vm747 = vcmp.gt.f32.partialorder %v683, 3.1415927
  %vm748 = vcmp.gt.f32.partialorder %v684, 3.1415927
  %vm749 = vcmp.gt.f32.partialorder %v685, 3.1415927
  %vm750 = vcmp.gt.f32.partialorder %v686, 3.1415927
  %vm751 = vcmp.gt.f32.partialorder %v687, 3.1415927
  %vm752 = vcmp.gt.f32.partialorder %v688, 3.1415927
  %vm753 = vcmp.gt.f32.partialorder %v689, 3.1415927
  %vm754 = vcmp.gt.f32.partialorder %v690, 3.1415927
  %vm755 = vcmp.gt.f32.partialorder %v691, 3.1415927
  %vm756 = vcmp.gt.f32.partialorder %v692, 3.1415927
  %vm757 = vcmp.gt.f32.partialorder %v693, 3.1415927
  %vm758 = vcmp.gt.f32.partialorder %v694, 3.1415927
  %vm759 = vcmp.gt.f32.partialorder %v695, 3.1415927
  %vm760 = vcmp.gt.f32.partialorder %v696, 3.1415927
  %vm761 = vcmp.gt.f32.partialorder %v697, 3.1415927
  %vm762 = vcmp.gt.f32.partialorder %v698, 3.1415927
  %vm763 = vcmp.gt.f32.partialorder %v699, 3.1415927
  %vm764 = vcmp.gt.f32.partialorder %v700, 3.1415927
  %vm765 = vcmp.gt.f32.partialorder %v701, 3.1415927
  %vm766 = vcmp.gt.f32.partialorder %v702, 3.1415927
  %vm767 = vcmp.gt.f32.partialorder %v703, 3.1415927
  %vm768 = vcmp.gt.f32.partialorder %v704, 3.1415927
  %vm769 = vcmp.gt.f32.partialorder %v705, 3.1415927
  %vm770 = vcmp.gt.f32.partialorder %v706, 3.1415927
  %vm771 = vcmp.gt.f32.partialorder %v707, 3.1415927
  %vm772 = vcmp.gt.f32.partialorder %v708, 3.1415927
  %vm773 = vcmp.gt.f32.partialorder %v709, 3.1415927
  %vm774 = vcmp.gt.f32.partialorder %v710, 3.1415927
  %vm775 = vcmp.gt.f32.partialorder %v711, 3.1415927
  %vm776 = vcmp.gt.f32.partialorder %v712, 3.1415927
  %vm777 = vcmp.gt.f32.partialorder %v713, 3.1415927
  %vm778 = vcmp.gt.f32.partialorder %v714, 3.1415927
  %v779 = vsub.f32 %v651, 6.2831855
  %v780 = vsub.f32 %v652, 6.2831855
  %v781 = vsub.f32 %v653, 6.2831855
  %v782 = vsub.f32 %v654, 6.2831855
  %v783 = vsub.f32 %v655, 6.2831855
  %v784 = vsub.f32 %v656, 6.2831855
  %v785 = vsub.f32 %v657, 6.2831855
  %v786 = vsub.f32 %v658, 6.2831855
  %v787 = vsub.f32 %v659, 6.2831855
  %v788 = vsub.f32 %v660, 6.2831855
  %v789 = vsub.f32 %v661, 6.2831855
  %v790 = vsub.f32 %v662, 6.2831855
  %v791 = vsub.f32 %v663, 6.2831855
  %v792 = vsub.f32 %v664, 6.2831855
  %v793 = vsub.f32 %v665, 6.2831855
  %v794 = vsub.f32 %v666, 6.2831855
  %v795 = vsub.f32 %v667, 6.2831855
  %v796 = vsub.f32 %v668, 6.2831855
  %v797 = vsub.f32 %v669, 6.2831855
  %v798 = vsub.f32 %v670, 6.2831855
  %v799 = vsub.f32 %v671, 6.2831855
  %v800 = vsub.f32 %v672, 6.2831855
  %v801 = vsub.f32 %v673, 6.2831855
  %v802 = vsub.f32 %v674, 6.2831855
  %v803 = vsub.f32 %v675, 6.2831855
  %v804 = vsub.f32 %v676, 6.2831855
  %v805 = vsub.f32 %v677, 6.2831855
  %v806 = vsub.f32 %v678, 6.2831855
  %v807 = vsub.f32 %v679, 6.2831855
  %v808 = vsub.f32 %v680, 6.2831855
  %v809 = vsub.f32 %v681, 6.2831855
  %v810 = vsub.f32 %v682, 6.2831855
  %v811 = vsub.f32 %v683, 6.2831855
  %v812 = vsub.f32 %v684, 6.2831855
  %v813 = vsub.f32 %v685, 6.2831855
  %v814 = vsub.f32 %v686, 6.2831855
  %v815 = vsub.f32 %v687, 6.2831855
  %v816 = vsub.f32 %v688, 6.2831855
  %v817 = vsub.f32 %v689, 6.2831855
  %v818 = vsub.f32 %v690, 6.2831855
  %v819 = vsub.f32 %v691, 6.2831855
  %v820 = vsub.f32 %v692, 6.2831855
  %v821 = vsub.f32 %v693, 6.2831855
  %v822 = vsub.f32 %v694, 6.2831855
  %v823 = vsub.f32 %v695, 6.2831855
  %v824 = vsub.f32 %v696, 6.2831855
  %v825 = vsub.f32 %v697, 6.2831855
  %v826 = vsub.f32 %v698, 6.2831855
  %v827 = vsub.f32 %v699, 6.2831855
  %v828 = vsub.f32 %v700, 6.2831855
  %v829 = vsub.f32 %v701, 6.2831855
  %v830 = vsub.f32 %v702, 6.2831855
  %v831 = vsub.f32 %v703, 6.2831855
  %v832 = vsub.f32 %v704, 6.2831855
  %v833 = vsub.f32 %v705, 6.2831855
  %v834 = vsub.f32 %v706, 6.2831855
  %v835 = vsub.f32 %v707, 6.2831855
  %v836 = vsub.f32 %v708, 6.2831855
  %v837 = vsub.f32 %v709, 6.2831855
  %v838 = vsub.f32 %v710, 6.2831855
  %v839 = vsub.f32 %v711, 6.2831855
  %v840 = vsub.f32 %v712, 6.2831855
  %v841 = vsub.f32 %v713, 6.2831855
  %v842 = vsub.f32 %v714, 6.2831855
  %v843 = vsel %vm715, %v779, %v651
  %v844 = vsel %vm716, %v780, %v652
  %v845 = vsel %vm717, %v781, %v653
  %v846 = vsel %vm718, %v782, %v654
  %v847 = vsel %vm719, %v783, %v655
  %v848 = vsel %vm720, %v784, %v656
  %v849 = vsel %vm721, %v785, %v657
  %v850 = vsel %vm722, %v786, %v658
  %v851 = vsel %vm723, %v787, %v659
  %v852 = vsel %vm724, %v788, %v660
  %v853 = vsel %vm725, %v789, %v661
  %v854 = vsel %vm726, %v790, %v662
  %v855 = vsel %vm727, %v791, %v663
  %v856 = vsel %vm728, %v792, %v664
  %v857 = vsel %vm729, %v793, %v665
  %v858 = vsel %vm730, %v794, %v666
  %v859 = vsel %vm731, %v795, %v667
  %v860 = vsel %vm732, %v796, %v668
  %v861 = vsel %vm733, %v797, %v669
  %v862 = vsel %vm734, %v798, %v670
  %v863 = vsel %vm735, %v799, %v671
  %v864 = vsel %vm736, %v800, %v672
  %v865 = vsel %vm737, %v801, %v673
  %v866 = vsel %vm738, %v802, %v674
  %v867 = vsel %vm739, %v803, %v675
  %v868 = vsel %vm740, %v804, %v676
  %v869 = vsel %vm741, %v805, %v677
  %v870 = vsel %vm742, %v806, %v678
  %v871 = vsel %vm743, %v807, %v679
  %v872 = vsel %vm744, %v808, %v680
  %v873 = vsel %vm745, %v809, %v681
  %v874 = vsel %vm746, %v810, %v682
  %v875 = vsel %vm747, %v811, %v683
  %v876 = vsel %vm748, %v812, %v684
  %v877 = vsel %vm749, %v813, %v685
  %v878 = vsel %vm750, %v814, %v686
  %v879 = vsel %vm751, %v815, %v687
  %v880 = vsel %vm752, %v816, %v688
  %v881 = vsel %vm753, %v817, %v689
  %v882 = vsel %vm754, %v818, %v690
  %v883 = vsel %vm755, %v819, %v691
  %v884 = vsel %vm756, %v820, %v692
  %v885 = vsel %vm757, %v821, %v693
  %v886 = vsel %vm758, %v822, %v694
  %v887 = vsel %vm759, %v823, %v695
  %v888 = vsel %vm760, %v824, %v696
  %v889 = vsel %vm761, %v825, %v697
  %v890 = vsel %vm762, %v826, %v698
  %v891 = vsel %vm763, %v827, %v699
  %v892 = vsel %vm764, %v828, %v700
  %v893 = vsel %vm765, %v829, %v701
  %v894 = vsel %vm766, %v830, %v702
  %v895 = vsel %vm767, %v831, %v703
  %v896 = vsel %vm768, %v832, %v704
  %v897 = vsel %vm769, %v833, %v705
  %v898 = vsel %vm770, %v834, %v706
  %v899 = vsel %vm771, %v835, %v707
  %v900 = vsel %vm772, %v836, %v708
  %v901 = vsel %vm773, %v837, %v709
  %v902 = vsel %vm774, %v838, %v710
  %v903 = vsel %vm775, %v839, %v711
  %v904 = vsel %vm776, %v840, %v712
  %v905 = vsel %vm777, %v841, %v713
  %v906 = vsel %vm778, %v842, %v714
  %vm907 = vcmp.lt.f32.partialorder %v843, -3.1415927
  %vm908 = vcmp.lt.f32.partialorder %v844, -3.1415927
  %vm909 = vcmp.lt.f32.partialorder %v845, -3.1415927
  %vm910 = vcmp.lt.f32.partialorder %v846, -3.1415927
  %vm911 = vcmp.lt.f32.partialorder %v847, -3.1415927
  %vm912 = vcmp.lt.f32.partialorder %v848, -3.1415927
  %vm913 = vcmp.lt.f32.partialorder %v849, -3.1415927
  %vm914 = vcmp.lt.f32.partialorder %v850, -3.1415927
  %vm915 = vcmp.lt.f32.partialorder %v851, -3.1415927
  %vm916 = vcmp.lt.f32.partialorder %v852, -3.1415927
  %vm917 = vcmp.lt.f32.partialorder %v853, -3.1415927
  %vm918 = vcmp.lt.f32.partialorder %v854, -3.1415927
  %vm919 = vcmp.lt.f32.partialorder %v855, -3.1415927
  %vm920 = vcmp.lt.f32.partialorder %v856, -3.1415927
  %vm921 = vcmp.lt.f32.partialorder %v857, -3.1415927
  %vm922 = vcmp.lt.f32.partialorder %v858, -3.1415927
  %vm923 = vcmp.lt.f32.partialorder %v859, -3.1415927
  %vm924 = vcmp.lt.f32.partialorder %v860, -3.1415927
  %vm925 = vcmp.lt.f32.partialorder %v861, -3.1415927
  %vm926 = vcmp.lt.f32.partialorder %v862, -3.1415927
  %vm927 = vcmp.lt.f32.partialorder %v863, -3.1415927
  %vm928 = vcmp.lt.f32.partialorder %v864, -3.1415927
  %vm929 = vcmp.lt.f32.partialorder %v865, -3.1415927
  %vm930 = vcmp.lt.f32.partialorder %v866, -3.1415927
  %vm931 = vcmp.lt.f32.partialorder %v867, -3.1415927
  %vm932 = vcmp.lt.f32.partialorder %v868, -3.1415927
  %vm933 = vcmp.lt.f32.partialorder %v869, -3.1415927
  %vm934 = vcmp.lt.f32.partialorder %v870, -3.1415927
  %vm935 = vcmp.lt.f32.partialorder %v871, -3.1415927
  %vm936 = vcmp.lt.f32.partialorder %v872, -3.1415927
  %vm937 = vcmp.lt.f32.partialorder %v873, -3.1415927
  %vm938 = vcmp.lt.f32.partialorder %v874, -3.1415927
  %vm939 = vcmp.lt.f32.partialorder %v875, -3.1415927
  %vm940 = vcmp.lt.f32.partialorder %v876, -3.1415927
  %vm941 = vcmp.lt.f32.partialorder %v877, -3.1415927
  %vm942 = vcmp.lt.f32.partialorder %v878, -3.1415927
  %vm943 = vcmp.lt.f32.partialorder %v879, -3.1415927
  %vm944 = vcmp.lt.f32.partialorder %v880, -3.1415927
  %vm945 = vcmp.lt.f32.partialorder %v881, -3.1415927
  %vm946 = vcmp.lt.f32.partialorder %v882, -3.1415927
  %vm947 = vcmp.lt.f32.partialorder %v883, -3.1415927
  %vm948 = vcmp.lt.f32.partialorder %v884, -3.1415927
  %vm949 = vcmp.lt.f32.partialorder %v885, -3.1415927
  %vm950 = vcmp.lt.f32.partialorder %v886, -3.1415927
  %vm951 = vcmp.lt.f32.partialorder %v887, -3.1415927
  %vm952 = vcmp.lt.f32.partialorder %v888, -3.1415927
  %vm953 = vcmp.lt.f32.partialorder %v889, -3.1415927
  %vm954 = vcmp.lt.f32.partialorder %v890, -3.1415927
  %vm955 = vcmp.lt.f32.partialorder %v891, -3.1415927
  %vm956 = vcmp.lt.f32.partialorder %v892, -3.1415927
  %vm957 = vcmp.lt.f32.partialorder %v893, -3.1415927
  %vm958 = vcmp.lt.f32.partialorder %v894, -3.1415927
  %vm959 = vcmp.lt.f32.partialorder %v895, -3.1415927
  %vm960 = vcmp.lt.f32.partialorder %v896, -3.1415927
  %vm961 = vcmp.lt.f32.partialorder %v897, -3.1415927
  %vm962 = vcmp.lt.f32.partialorder %v898, -3.1415927
  %vm963 = vcmp.lt.f32.partialorder %v899, -3.1415927
  %vm964 = vcmp.lt.f32.partialorder %v900, -3.1415927
  %vm965 = vcmp.lt.f32.partialorder %v901, -3.1415927
  %vm966 = vcmp.lt.f32.partialorder %v902, -3.1415927
  %vm967 = vcmp.lt.f32.partialorder %v903, -3.1415927
  %vm968 = vcmp.lt.f32.partialorder %v904, -3.1415927
  %vm969 = vcmp.lt.f32.partialorder %v905, -3.1415927
  %vm970 = vcmp.lt.f32.partialorder %v906, -3.1415927
  %v971 = vadd.f32 %v843, 6.2831855
  %v972 = vadd.f32 %v844, 6.2831855
  %v973 = vadd.f32 %v845, 6.2831855
  %v974 = vadd.f32 %v846, 6.2831855
  %v975 = vadd.f32 %v847, 6.2831855
  %v976 = vadd.f32 %v848, 6.2831855
  %v977 = vadd.f32 %v849, 6.2831855
  %v978 = vadd.f32 %v850, 6.2831855
  %v979 = vadd.f32 %v851, 6.2831855
  %v980 = vadd.f32 %v852, 6.2831855
  %v981 = vadd.f32 %v853, 6.2831855
  %v982 = vadd.f32 %v854, 6.2831855
  %v983 = vadd.f32 %v855, 6.2831855
  %v984 = vadd.f32 %v856, 6.2831855
  %v985 = vadd.f32 %v857, 6.2831855
  %v986 = vadd.f32 %v858, 6.2831855
  %v987 = vadd.f32 %v859, 6.2831855
  %v988 = vadd.f32 %v860, 6.2831855
  %v989 = vadd.f32 %v861, 6.2831855
  %v990 = vadd.f32 %v862, 6.2831855
  %v991 = vadd.f32 %v863, 6.2831855
  %v992 = vadd.f32 %v864, 6.2831855
  %v993 = vadd.f32 %v865, 6.2831855
  %v994 = vadd.f32 %v866, 6.2831855
  %v995 = vadd.f32 %v867, 6.2831855
  %v996 = vadd.f32 %v868, 6.2831855
  %v997 = vadd.f32 %v869, 6.2831855
  %v998 = vadd.f32 %v870, 6.2831855
  %v999 = vadd.f32 %v871, 6.2831855
  %v1000 = vadd.f32 %v872, 6.2831855
  %v1001 = vadd.f32 %v873, 6.2831855
  %v1002 = vadd.f32 %v874, 6.2831855
  %v1003 = vadd.f32 %v875, 6.2831855
  %v1004 = vadd.f32 %v876, 6.2831855
  %v1005 = vadd.f32 %v877, 6.2831855
  %v1006 = vadd.f32 %v878, 6.2831855
  %v1007 = vadd.f32 %v879, 6.2831855
  %v1008 = vadd.f32 %v880, 6.2831855
  %v1009 = vadd.f32 %v881, 6.2831855
  %v1010 = vadd.f32 %v882, 6.2831855
  %v1011 = vadd.f32 %v883, 6.2831855
  %v1012 = vadd.f32 %v884, 6.2831855
  %v1013 = vadd.f32 %v885, 6.2831855
  %v1014 = vadd.f32 %v886, 6.2831855
  %v1015 = vadd.f32 %v887, 6.2831855
  %v1016 = vadd.f32 %v888, 6.2831855
  %v1017 = vadd.f32 %v889, 6.2831855
  %v1018 = vadd.f32 %v890, 6.2831855
  %v1019 = vadd.f32 %v891, 6.2831855
  %v1020 = vadd.f32 %v892, 6.2831855
  %v1021 = vadd.f32 %v893, 6.2831855
  %v1022 = vadd.f32 %v894, 6.2831855
  %v1023 = vadd.f32 %v895, 6.2831855
  %v1024 = vadd.f32 %v896, 6.2831855
  %v1025 = vadd.f32 %v897, 6.2831855
  %v1026 = vadd.f32 %v898, 6.2831855
  %v1027 = vadd.f32 %v899, 6.2831855
  %v1028 = vadd.f32 %v900, 6.2831855
  %v1029 = vadd.f32 %v901, 6.2831855
  %v1030 = vadd.f32 %v902, 6.2831855
  %v1031 = vadd.f32 %v903, 6.2831855
  %v1032 = vadd.f32 %v904, 6.2831855
  %v1033 = vadd.f32 %v905, 6.2831855
  %v1034 = vadd.f32 %v906, 6.2831855
  %v1035 = vsel %vm907, %v971, %v843
  %v1036 = vsel %vm908, %v972, %v844
  %v1037 = vsel %vm909, %v973, %v845
  %v1038 = vsel %vm910, %v974, %v846
  %v1039 = vsel %vm911, %v975, %v847
  %v1040 = vsel %vm912, %v976, %v848
  %v1041 = vsel %vm913, %v977, %v849
  %v1042 = vsel %vm914, %v978, %v850
  %v1043 = vsel %vm915, %v979, %v851
  %v1044 = vsel %vm916, %v980, %v852
  %v1045 = vsel %vm917, %v981, %v853
  %v1046 = vsel %vm918, %v982, %v854
  %v1047 = vsel %vm919, %v983, %v855
  %v1048 = vsel %vm920, %v984, %v856
  %v1049 = vsel %vm921, %v985, %v857
  %v1050 = vsel %vm922, %v986, %v858
  %v1051 = vsel %vm923, %v987, %v859
  %v1052 = vsel %vm924, %v988, %v860
  %v1053 = vsel %vm925, %v989, %v861
  %v1054 = vsel %vm926, %v990, %v862
  %v1055 = vsel %vm927, %v991, %v863
  %v1056 = vsel %vm928, %v992, %v864
  %v1057 = vsel %vm929, %v993, %v865
  %v1058 = vsel %vm930, %v994, %v866
  %v1059 = vsel %vm931, %v995, %v867
  %v1060 = vsel %vm932, %v996, %v868
  %v1061 = vsel %vm933, %v997, %v869
  %v1062 = vsel %vm934, %v998, %v870
  %v1063 = vsel %vm935, %v999, %v871
  %v1064 = vsel %vm936, %v1000, %v872
  %v1065 = vsel %vm937, %v1001, %v873
  %v1066 = vsel %vm938, %v1002, %v874
  %v1067 = vsel %vm939, %v1003, %v875
  %v1068 = vsel %vm940, %v1004, %v876
  %v1069 = vsel %vm941, %v1005, %v877
  %v1070 = vsel %vm942, %v1006, %v878
  %v1071 = vsel %vm943, %v1007, %v879
  %v1072 = vsel %vm944, %v1008, %v880
  %v1073 = vsel %vm945, %v1009, %v881
  %v1074 = vsel %vm946, %v1010, %v882
  %v1075 = vsel %vm947, %v1011, %v883
  %v1076 = vsel %vm948, %v1012, %v884
  %v1077 = vsel %vm949, %v1013, %v885
  %v1078 = vsel %vm950, %v1014, %v886
  %v1079 = vsel %vm951, %v1015, %v887
  %v1080 = vsel %vm952, %v1016, %v888
  %v1081 = vsel %vm953, %v1017, %v889
  %v1082 = vsel %vm954, %v1018, %v890
  %v1083 = vsel %vm955, %v1019, %v891
  %v1084 = vsel %vm956, %v1020, %v892
  %v1085 = vsel %vm957, %v1021, %v893
  %v1086 = vsel %vm958, %v1022, %v894
  %v1087 = vsel %vm959, %v1023, %v895
  %v1088 = vsel %vm960, %v1024, %v896
  %v1089 = vsel %vm961, %v1025, %v897
  %v1090 = vsel %vm962, %v1026, %v898
  %v1091 = vsel %vm963, %v1027, %v899
  %v1092 = vsel %vm964, %v1028, %v900
  %v1093 = vsel %vm965, %v1029, %v901
  %v1094 = vsel %vm966, %v1030, %v902
  %v1095 = vsel %vm967, %v1031, %v903
  %v1096 = vsel %vm968, %v1032, %v904
  %v1097 = vsel %vm969, %v1033, %v905
  %v1098 = vsel %vm970, %v1034, %v906
  %1099 = vset.pattern.permute.xlu0 1
  %1100 = vperm.xlu0 %1099, %v75
  %v1101 = vpop.permute.xlu0 %1100
  %1103 = vset.pattern.permute.xlu0 1
  %1104 = vperm.xlu0 %1103, %v76
  %v1105 = vpop.permute.xlu0 %1104
  %1107 = vset.pattern.permute.xlu0 1
  %1108 = vperm.xlu0 %1107, %v77
  %v1109 = vpop.permute.xlu0 %1108
  %1111 = vset.pattern.permute.xlu0 1
  %1112 = vperm.xlu0 %1111, %v78
  %v1113 = vpop.permute.xlu0 %1112
  %1115 = vset.pattern.permute.xlu0 1
  %1116 = vperm.xlu0 %1115, %v79
  %v1117 = vpop.permute.xlu0 %1116
  %1119 = vset.pattern.permute.xlu0 1
  %1120 = vperm.xlu0 %1119, %v80
  %v1121 = vpop.permute.xlu0 %1120
  %1123 = vset.pattern.permute.xlu0 1
  %1124 = vperm.xlu0 %1123, %v81
  %v1125 = vpop.permute.xlu0 %1124
  %1127 = vset.pattern.permute.xlu0 1
  %1128 = vperm.xlu0 %1127, %v82
  %v1129 = vpop.permute.xlu0 %1128
  %1131 = vset.pattern.permute.xlu0 1
  %1132 = vperm.xlu0 %1131, %v83
  %v1133 = vpop.permute.xlu0 %1132
  %1135 = vset.pattern.permute.xlu0 1
  %1136 = vperm.xlu0 %1135, %v84
  %v1137 = vpop.permute.xlu0 %1136
  %1139 = vset.pattern.permute.xlu0 1
  %1140 = vperm.xlu0 %1139, %v85
  %v1141 = vpop.permute.xlu0 %1140
  %1143 = vset.pattern.permute.xlu0 1
  %1144 = vperm.xlu0 %1143, %v86
  %v1145 = vpop.permute.xlu0 %1144
  %1147 = vset.pattern.permute.xlu0 1
  %1148 = vperm.xlu0 %1147, %v87
  %v1149 = vpop.permute.xlu0 %1148
  %1151 = vset.pattern.permute.xlu0 1
  %1152 = vperm.xlu0 %1151, %v88
  %v1153 = vpop.permute.xlu0 %1152
  %1155 = vset.pattern.permute.xlu0 1
  %1156 = vperm.xlu0 %1155, %v89
  %v1157 = vpop.permute.xlu0 %1156
  %1159 = vset.pattern.permute.xlu0 1
  %1160 = vperm.xlu0 %1159, %v90
  %v1161 = vpop.permute.xlu0 %1160
  %1163 = vset.pattern.permute.xlu0 1
  %1164 = vperm.xlu0 %1163, %v91
  %v1165 = vpop.permute.xlu0 %1164
  %1167 = vset.pattern.permute.xlu0 1
  %1168 = vperm.xlu0 %1167, %v92
  %v1169 = vpop.permute.xlu0 %1168
  %1171 = vset.pattern.permute.xlu0 1
  %1172 = vperm.xlu0 %1171, %v93
  %v1173 = vpop.permute.xlu0 %1172
  %1175 = vset.pattern.permute.xlu0 1
  %1176 = vperm.xlu0 %1175, %v94
  %v1177 = vpop.permute.xlu0 %1176
  %1179 = vset.pattern.permute.xlu0 1
  %1180 = vperm.xlu0 %1179, %v95
  %v1181 = vpop.permute.xlu0 %1180
  %1183 = vset.pattern.permute.xlu0 1
  %1184 = vperm.xlu0 %1183, %v96
  %v1185 = vpop.permute.xlu0 %1184
  %1187 = vset.pattern.permute.xlu0 1
  %1188 = vperm.xlu0 %1187, %v97
  %v1189 = vpop.permute.xlu0 %1188
  %1191 = vset.pattern.permute.xlu0 1
  %1192 = vperm.xlu0 %1191, %v98
  %v1193 = vpop.permute.xlu0 %1192
  %1195 = vset.pattern.permute.xlu0 1
  %1196 = vperm.xlu0 %1195, %v99
  %v1197 = vpop.permute.xlu0 %1196
  %1199 = vset.pattern.permute.xlu0 1
  %1200 = vperm.xlu0 %1199, %v100
  %v1201 = vpop.permute.xlu0 %1200
  %1203 = vset.pattern.permute.xlu0 1
  %1204 = vperm.xlu0 %1203, %v101
  %v1205 = vpop.permute.xlu0 %1204
  %1207 = vset.pattern.permute.xlu0 1
  %1208 = vperm.xlu0 %1207, %v102
  %v1209 = vpop.permute.xlu0 %1208
  %1211 = vset.pattern.permute.xlu0 1
  %1212 = vperm.xlu0 %1211, %v103
  %v1213 = vpop.permute.xlu0 %1212
  %1215 = vset.pattern.permute.xlu0 1
  %1216 = vperm.xlu0 %1215, %v104
  %v1217 = vpop.permute.xlu0 %1216
  %1219 = vset.pattern.permute.xlu0 1
  %1220 = vperm.xlu0 %1219, %v105
  %v1221 = vpop.permute.xlu0 %1220
  %1223 = vset.pattern.permute.xlu0 1
  %1224 = vperm.xlu0 %1223, %v106
  %v1225 = vpop.permute.xlu0 %1224
  %1227 = vset.pattern.permute.xlu0 1
  %1228 = vperm.xlu0 %1227, %v107
  %v1229 = vpop.permute.xlu0 %1228
  %1231 = vset.pattern.permute.xlu0 1
  %1232 = vperm.xlu0 %1231, %v108
  %v1233 = vpop.permute.xlu0 %1232
  %1235 = vset.pattern.permute.xlu0 1
  %1236 = vperm.xlu0 %1235, %v109
  %v1237 = vpop.permute.xlu0 %1236
  %1239 = vset.pattern.permute.xlu0 1
  %1240 = vperm.xlu0 %1239, %v110
  %v1241 = vpop.permute.xlu0 %1240
  %1243 = vset.pattern.permute.xlu0 1
  %1244 = vperm.xlu0 %1243, %v111
  %v1245 = vpop.permute.xlu0 %1244
  %1247 = vset.pattern.permute.xlu0 1
  %1248 = vperm.xlu0 %1247, %v112
  %v1249 = vpop.permute.xlu0 %1248
  %1251 = vset.pattern.permute.xlu0 1
  %1252 = vperm.xlu0 %1251, %v113
  %v1253 = vpop.permute.xlu0 %1252
  %1255 = vset.pattern.permute.xlu0 1
  %1256 = vperm.xlu0 %1255, %v114
  %v1257 = vpop.permute.xlu0 %1256
  %1259 = vset.pattern.permute.xlu0 1
  %1260 = vperm.xlu0 %1259, %v115
  %v1261 = vpop.permute.xlu0 %1260
  %1263 = vset.pattern.permute.xlu0 1
  %1264 = vperm.xlu0 %1263, %v116
  %v1265 = vpop.permute.xlu0 %1264
  %1267 = vset.pattern.permute.xlu0 1
  %1268 = vperm.xlu0 %1267, %v117
  %v1269 = vpop.permute.xlu0 %1268
  %1271 = vset.pattern.permute.xlu0 1
  %1272 = vperm.xlu0 %1271, %v118
  %v1273 = vpop.permute.xlu0 %1272
  %1275 = vset.pattern.permute.xlu0 1
  %1276 = vperm.xlu0 %1275, %v119
  %v1277 = vpop.permute.xlu0 %1276
  %1279 = vset.pattern.permute.xlu0 1
  %1280 = vperm.xlu0 %1279, %v120
  %v1281 = vpop.permute.xlu0 %1280
  %1283 = vset.pattern.permute.xlu0 1
  %1284 = vperm.xlu0 %1283, %v121
  %v1285 = vpop.permute.xlu0 %1284
  %1287 = vset.pattern.permute.xlu0 1
  %1288 = vperm.xlu0 %1287, %v122
  %v1289 = vpop.permute.xlu0 %1288
  %1291 = vset.pattern.permute.xlu0 1
  %1292 = vperm.xlu0 %1291, %v123
  %v1293 = vpop.permute.xlu0 %1292
  %1295 = vset.pattern.permute.xlu0 1
  %1296 = vperm.xlu0 %1295, %v124
  %v1297 = vpop.permute.xlu0 %1296
  %1299 = vset.pattern.permute.xlu0 1
  %1300 = vperm.xlu0 %1299, %v125
  %v1301 = vpop.permute.xlu0 %1300
  %1303 = vset.pattern.permute.xlu0 1
  %1304 = vperm.xlu0 %1303, %v126
  %v1305 = vpop.permute.xlu0 %1304
  %1307 = vset.pattern.permute.xlu0 1
  %1308 = vperm.xlu0 %1307, %v127
  %v1309 = vpop.permute.xlu0 %1308
  %1311 = vset.pattern.permute.xlu0 1
  %1312 = vperm.xlu0 %1311, %v128
  %v1313 = vpop.permute.xlu0 %1312
  %1315 = vset.pattern.permute.xlu0 1
  %1316 = vperm.xlu0 %1315, %v129
  %v1317 = vpop.permute.xlu0 %1316
  %1319 = vset.pattern.permute.xlu0 1
  %1320 = vperm.xlu0 %1319, %v130
  %v1321 = vpop.permute.xlu0 %1320
  %1323 = vset.pattern.permute.xlu0 1
  %1324 = vperm.xlu0 %1323, %v131
  %v1325 = vpop.permute.xlu0 %1324
  %1327 = vset.pattern.permute.xlu0 1
  %1328 = vperm.xlu0 %1327, %v132
  %v1329 = vpop.permute.xlu0 %1328
  %1331 = vset.pattern.permute.xlu0 1
  %1332 = vperm.xlu0 %1331, %v133
  %v1333 = vpop.permute.xlu0 %1332
  %1335 = vset.pattern.permute.xlu0 1
  %1336 = vperm.xlu0 %1335, %v134
  %v1337 = vpop.permute.xlu0 %1336
  %1339 = vset.pattern.permute.xlu0 1
  %1340 = vperm.xlu0 %1339, %v135
  %v1341 = vpop.permute.xlu0 %1340
  %1343 = vset.pattern.permute.xlu0 1
  %1344 = vperm.xlu0 %1343, %v136
  %v1345 = vpop.permute.xlu0 %1344
  %1347 = vset.pattern.permute.xlu0 1
  %1348 = vperm.xlu0 %1347, %v137
  %v1349 = vpop.permute.xlu0 %1348
  %1351 = vset.pattern.permute.xlu0 1
  %1352 = vperm.xlu0 %1351, %v138
  %v1353 = vpop.permute.xlu0 %1352
  %v1355 = vmul.f32 %v1035, %v1101
  %v1356 = vmul.f32 %v1036, %v1105
  %v1357 = vmul.f32 %v1037, %v1109
  %v1358 = vmul.f32 %v1038, %v1113
  %v1359 = vmul.f32 %v1039, %v1117
  %v1360 = vmul.f32 %v1040, %v1121
  %v1361 = vmul.f32 %v1041, %v1125
  %v1362 = vmul.f32 %v1042, %v1129
  %v1363 = vmul.f32 %v1043, %v1133
  %v1364 = vmul.f32 %v1044, %v1137
  %v1365 = vmul.f32 %v1045, %v1141
  %v1366 = vmul.f32 %v1046, %v1145
  %v1367 = vmul.f32 %v1047, %v1149
  %v1368 = vmul.f32 %v1048, %v1153
  %v1369 = vmul.f32 %v1049, %v1157
  %v1370 = vmul.f32 %v1050, %v1161
  %v1371 = vmul.f32 %v1051, %v1165
  %v1372 = vmul.f32 %v1052, %v1169
  %v1373 = vmul.f32 %v1053, %v1173
  %v1374 = vmul.f32 %v1054, %v1177
  %v1375 = vmul.f32 %v1055, %v1181
  %v1376 = vmul.f32 %v1056, %v1185
  %v1377 = vmul.f32 %v1057, %v1189
  %v1378 = vmul.f32 %v1058, %v1193
  %v1379 = vmul.f32 %v1059, %v1197
  %v1380 = vmul.f32 %v1060, %v1201
  %v1381 = vmul.f32 %v1061, %v1205
  %v1382 = vmul.f32 %v1062, %v1209
  %v1383 = vmul.f32 %v1063, %v1213
  %v1384 = vmul.f32 %v1064, %v1217
  %v1385 = vmul.f32 %v1065, %v1221
  %v1386 = vmul.f32 %v1066, %v1225
  %v1387 = vmul.f32 %v1067, %v1229
  %v1388 = vmul.f32 %v1068, %v1233
  %v1389 = vmul.f32 %v1069, %v1237
  %v1390 = vmul.f32 %v1070, %v1241
  %v1391 = vmul.f32 %v1071, %v1245
  %v1392 = vmul.f32 %v1072, %v1249
  %v1393 = vmul.f32 %v1073, %v1253
  %v1394 = vmul.f32 %v1074, %v1257
  %v1395 = vmul.f32 %v1075, %v1261
  %v1396 = vmul.f32 %v1076, %v1265
  %v1397 = vmul.f32 %v1077, %v1269
  %v1398 = vmul.f32 %v1078, %v1273
  %v1399 = vmul.f32 %v1079, %v1277
  %v1400 = vmul.f32 %v1080, %v1281
  %v1401 = vmul.f32 %v1081, %v1285
  %v1402 = vmul.f32 %v1082, %v1289
  %v1403 = vmul.f32 %v1083, %v1293
  %v1404 = vmul.f32 %v1084, %v1297
  %v1405 = vmul.f32 %v1085, %v1301
  %v1406 = vmul.f32 %v1086, %v1305
  %v1407 = vmul.f32 %v1087, %v1309
  %v1408 = vmul.f32 %v1088, %v1313
  %v1409 = vmul.f32 %v1089, %v1317
  %v1410 = vmul.f32 %v1090, %v1321
  %v1411 = vmul.f32 %v1091, %v1325
  %v1412 = vmul.f32 %v1092, %v1329
  %v1413 = vmul.f32 %v1093, %v1333
  %v1414 = vmul.f32 %v1094, %v1337
  %v1415 = vmul.f32 %v1095, %v1341
  %v1416 = vmul.f32 %v1096, %v1345
  %v1417 = vmul.f32 %v1097, %v1349
  %v1418 = vmul.f32 %v1098, %v1353
  %1419 = vst [vmem:[%s2] sm:$0xff] %v1355
  %1420 = vst [vmem:[%s2 + $0x8] sm:$0xff] %v1356
  %1421 = vst [vmem:[%s2 + $0x10] sm:$0xff] %v1357
  %1422 = vst [vmem:[%s2 + $0x18] sm:$0xff] %v1358
  %1423 = vst [vmem:[%s2 + $0x20] sm:$0xff] %v1359
  %1424 = vst [vmem:[%s2 + $0x28] sm:$0xff] %v1360
  %1425 = vst [vmem:[%s2 + $0x30] sm:$0xff] %v1361
  %1426 = vst [vmem:[%s2 + $0x38] sm:$0xff] %v1362
  %1427 = vst [vmem:[%s2 + $0x40] sm:$0xff] %v1363
  %1428 = vst [vmem:[%s2 + $0x48] sm:$0xff] %v1364
  %1429 = vst [vmem:[%s2 + $0x50] sm:$0xff] %v1365
  %1430 = vst [vmem:[%s2 + $0x58] sm:$0xff] %v1366
  %1431 = vst [vmem:[%s2 + $0x60] sm:$0xff] %v1367
  %1432 = vst [vmem:[%s2 + $0x68] sm:$0xff] %v1368
  %1433 = vst [vmem:[%s2 + $0x70] sm:$0xff] %v1369
  %1434 = vst [vmem:[%s2 + $0x78] sm:$0xff] %v1370
  %1435 = vst [vmem:[%s2 + $0x80] sm:$0xff] %v1371
  %1436 = vst [vmem:[%s2 + $0x88] sm:$0xff] %v1372
  %1437 = vst [vmem:[%s2 + $0x90] sm:$0xff] %v1373
  %1438 = vst [vmem:[%s2 + $0x98] sm:$0xff] %v1374
  %1439 = vst [vmem:[%s2 + $0xa0] sm:$0xff] %v1375
  %1440 = vst [vmem:[%s2 + $0xa8] sm:$0xff] %v1376
  %1441 = vst [vmem:[%s2 + $0xb0] sm:$0xff] %v1377
  %1442 = vst [vmem:[%s2 + $0xb8] sm:$0xff] %v1378
  %1443 = vst [vmem:[%s2 + $0xc0] sm:$0xff] %v1379
  %1444 = vst [vmem:[%s2 + $0xc8] sm:$0xff] %v1380
  %1445 = vst [vmem:[%s2 + $0xd0] sm:$0xff] %v1381
  %1446 = vst [vmem:[%s2 + $0xd8] sm:$0xff] %v1382
  %1447 = vst [vmem:[%s2 + $0xe0] sm:$0xff] %v1383
  %1448 = vst [vmem:[%s2 + $0xe8] sm:$0xff] %v1384
  %1449 = vst [vmem:[%s2 + $0xf0] sm:$0xff] %v1385
  %1450 = vst [vmem:[%s2 + $0xf8] sm:$0xff] %v1386
  %1451 = vst [vmem:[%s2 + $0x100] sm:$0xff] %v1387
  %1452 = vst [vmem:[%s2 + $0x108] sm:$0xff] %v1388
  %1453 = vst [vmem:[%s2 + $0x110] sm:$0xff] %v1389
  %1454 = vst [vmem:[%s2 + $0x118] sm:$0xff] %v1390
  %1455 = vst [vmem:[%s2 + $0x120] sm:$0xff] %v1391
  %1456 = vst [vmem:[%s2 + $0x128] sm:$0xff] %v1392
  %1457 = vst [vmem:[%s2 + $0x130] sm:$0xff] %v1393
  %1458 = vst [vmem:[%s2 + $0x138] sm:$0xff] %v1394
  %1459 = vst [vmem:[%s2 + $0x140] sm:$0xff] %v1395
  %1460 = vst [vmem:[%s2 + $0x148] sm:$0xff] %v1396
  %1461 = vst [vmem:[%s2 + $0x150] sm:$0xff] %v1397
  %1462 = vst [vmem:[%s2 + $0x158] sm:$0xff] %v1398
  %1463 = vst [vmem:[%s2 + $0x160] sm:$0xff] %v1399
  %1464 = vst [vmem:[%s2 + $0x168] sm:$0xff] %v1400
  %1465 = vst [vmem:[%s2 + $0x170] sm:$0xff] %v1401
  %1466 = vst [vmem:[%s2 + $0x178] sm:$0xff] %v1402
  %1467 = vst [vmem:[%s2 + $0x180] sm:$0xff] %v1403
  %1468 = vst [vmem:[%s2 + $0x188] sm:$0xff] %v1404
  %1469 = vst [vmem:[%s2 + $0x190] sm:$0xff] %v1405
  %1470 = vst [vmem:[%s2 + $0x198] sm:$0xff] %v1406
  %1471 = vst [vmem:[%s2 + $0x1a0] sm:$0xff] %v1407
  %1472 = vst [vmem:[%s2 + $0x1a8] sm:$0xff] %v1408
  %1473 = vst [vmem:[%s2 + $0x1b0] sm:$0xff] %v1409
  %1474 = vst [vmem:[%s2 + $0x1b8] sm:$0xff] %v1410
  %1475 = vst [vmem:[%s2 + $0x1c0] sm:$0xff] %v1411
  %1476 = vst [vmem:[%s2 + $0x1c8] sm:$0xff] %v1412
  %1477 = vst [vmem:[%s2 + $0x1d0] sm:$0xff] %v1413
  %1478 = vst [vmem:[%s2 + $0x1d8] sm:$0xff] %v1414
  %1479 = vst [vmem:[%s2 + $0x1e0] sm:$0xff] %v1415
  %1480 = vst [vmem:[%s2 + $0x1e8] sm:$0xff] %v1416
  %1481 = vst [vmem:[%s2 + $0x1f0] sm:$0xff] %v1417
  %1482 = vst [vmem:[%s2 + $0x1f8] sm:$0xff] %v1418
  %1547 = vrot.lane.b32.xlu0 %v11, 3
  %v1548 = vpop.permute.xlu0 %1547
  %1549 = vrot.lane.b32.xlu0 %v12, 3
  %v1550 = vpop.permute.xlu0 %1549
  %1551 = vrot.lane.b32.xlu0 %v13, 3
  %v1552 = vpop.permute.xlu0 %1551
  %1553 = vrot.lane.b32.xlu0 %v14, 3
  %v1554 = vpop.permute.xlu0 %1553
  %1555 = vrot.lane.b32.xlu0 %v15, 3
  %v1556 = vpop.permute.xlu0 %1555
  %1557 = vrot.lane.b32.xlu0 %v16, 3
  %v1558 = vpop.permute.xlu0 %1557
  %1559 = vrot.lane.b32.xlu0 %v17, 3
  %v1560 = vpop.permute.xlu0 %1559
  %1561 = vrot.lane.b32.xlu0 %v18, 3
  %v1562 = vpop.permute.xlu0 %1561
  %1563 = vrot.lane.b32.xlu0 %v19, 3
  %v1564 = vpop.permute.xlu0 %1563
  %1565 = vrot.lane.b32.xlu0 %v20, 3
  %v1566 = vpop.permute.xlu0 %1565
  %1567 = vrot.lane.b32.xlu0 %v21, 3
  %v1568 = vpop.permute.xlu0 %1567
  %1569 = vrot.lane.b32.xlu0 %v22, 3
  %v1570 = vpop.permute.xlu0 %1569
  %1571 = vrot.lane.b32.xlu0 %v23, 3
  %v1572 = vpop.permute.xlu0 %1571
  %1573 = vrot.lane.b32.xlu0 %v24, 3
  %v1574 = vpop.permute.xlu0 %1573
  %1575 = vrot.lane.b32.xlu0 %v25, 3
  %v1576 = vpop.permute.xlu0 %1575
  %1577 = vrot.lane.b32.xlu0 %v26, 3
  %v1578 = vpop.permute.xlu0 %1577
  %1579 = vrot.lane.b32.xlu0 %v27, 3
  %v1580 = vpop.permute.xlu0 %1579
  %1581 = vrot.lane.b32.xlu0 %v28, 3
  %v1582 = vpop.permute.xlu0 %1581
  %1583 = vrot.lane.b32.xlu0 %v29, 3
  %v1584 = vpop.permute.xlu0 %1583
  %1585 = vrot.lane.b32.xlu0 %v30, 3
  %v1586 = vpop.permute.xlu0 %1585
  %1587 = vrot.lane.b32.xlu0 %v31, 3
  %v1588 = vpop.permute.xlu0 %1587
  %1589 = vrot.lane.b32.xlu0 %v32, 3
  %v1590 = vpop.permute.xlu0 %1589
  %1591 = vrot.lane.b32.xlu0 %v33, 3
  %v1592 = vpop.permute.xlu0 %1591
  %1593 = vrot.lane.b32.xlu0 %v34, 3
  %v1594 = vpop.permute.xlu0 %1593
  %1595 = vrot.lane.b32.xlu0 %v35, 3
  %v1596 = vpop.permute.xlu0 %1595
  %1597 = vrot.lane.b32.xlu0 %v36, 3
  %v1598 = vpop.permute.xlu0 %1597
  %1599 = vrot.lane.b32.xlu0 %v37, 3
  %v1600 = vpop.permute.xlu0 %1599
  %1601 = vrot.lane.b32.xlu0 %v38, 3
  %v1602 = vpop.permute.xlu0 %1601
  %1603 = vrot.lane.b32.xlu0 %v39, 3
  %v1604 = vpop.permute.xlu0 %1603
  %1605 = vrot.lane.b32.xlu0 %v40, 3
  %v1606 = vpop.permute.xlu0 %1605
  %1607 = vrot.lane.b32.xlu0 %v41, 3
  %v1608 = vpop.permute.xlu0 %1607
  %1609 = vrot.lane.b32.xlu0 %v42, 3
  %v1610 = vpop.permute.xlu0 %1609
  %1611 = vrot.lane.b32.xlu0 %v43, 3
  %v1612 = vpop.permute.xlu0 %1611
  %1613 = vrot.lane.b32.xlu0 %v44, 3
  %v1614 = vpop.permute.xlu0 %1613
  %1615 = vrot.lane.b32.xlu0 %v45, 3
  %v1616 = vpop.permute.xlu0 %1615
  %1617 = vrot.lane.b32.xlu0 %v46, 3
  %v1618 = vpop.permute.xlu0 %1617
  %1619 = vrot.lane.b32.xlu0 %v47, 3
  %v1620 = vpop.permute.xlu0 %1619
  %1621 = vrot.lane.b32.xlu0 %v48, 3
  %v1622 = vpop.permute.xlu0 %1621
  %1623 = vrot.lane.b32.xlu0 %v49, 3
  %v1624 = vpop.permute.xlu0 %1623
  %1625 = vrot.lane.b32.xlu0 %v50, 3
  %v1626 = vpop.permute.xlu0 %1625
  %1627 = vrot.lane.b32.xlu0 %v51, 3
  %v1628 = vpop.permute.xlu0 %1627
  %1629 = vrot.lane.b32.xlu0 %v52, 3
  %v1630 = vpop.permute.xlu0 %1629
  %1631 = vrot.lane.b32.xlu0 %v53, 3
  %v1632 = vpop.permute.xlu0 %1631
  %1633 = vrot.lane.b32.xlu0 %v54, 3
  %v1634 = vpop.permute.xlu0 %1633
  %1635 = vrot.lane.b32.xlu0 %v55, 3
  %v1636 = vpop.permute.xlu0 %1635
  %1637 = vrot.lane.b32.xlu0 %v56, 3
  %v1638 = vpop.permute.xlu0 %1637
  %1639 = vrot.lane.b32.xlu0 %v57, 3
  %v1640 = vpop.permute.xlu0 %1639
  %1641 = vrot.lane.b32.xlu0 %v58, 3
  %v1642 = vpop.permute.xlu0 %1641
  %1643 = vrot.lane.b32.xlu0 %v59, 3
  %v1644 = vpop.permute.xlu0 %1643
  %1645 = vrot.lane.b32.xlu0 %v60, 3
  %v1646 = vpop.permute.xlu0 %1645
  %1647 = vrot.lane.b32.xlu0 %v61, 3
  %v1648 = vpop.permute.xlu0 %1647
  %1649 = vrot.lane.b32.xlu0 %v62, 3
  %v1650 = vpop.permute.xlu0 %1649
  %1651 = vrot.lane.b32.xlu0 %v63, 3
  %v1652 = vpop.permute.xlu0 %1651
  %1653 = vrot.lane.b32.xlu0 %v64, 3
  %v1654 = vpop.permute.xlu0 %1653
  %1655 = vrot.lane.b32.xlu0 %v65, 3
  %v1656 = vpop.permute.xlu0 %1655
  %1657 = vrot.lane.b32.xlu0 %v66, 3
  %v1658 = vpop.permute.xlu0 %1657
  %1659 = vrot.lane.b32.xlu0 %v67, 3
  %v1660 = vpop.permute.xlu0 %1659
  %1661 = vrot.lane.b32.xlu0 %v68, 3
  %v1662 = vpop.permute.xlu0 %1661
  %1663 = vrot.lane.b32.xlu0 %v69, 3
  %v1664 = vpop.permute.xlu0 %1663
  %1665 = vrot.lane.b32.xlu0 %v70, 3
  %v1666 = vpop.permute.xlu0 %1665
  %1667 = vrot.lane.b32.xlu0 %v71, 3
  %v1668 = vpop.permute.xlu0 %1667
  %1669 = vrot.lane.b32.xlu0 %v72, 3
  %v1670 = vpop.permute.xlu0 %1669
  %1671 = vrot.lane.b32.xlu0 %v73, 3
  %v1672 = vpop.permute.xlu0 %1671
  %1673 = vrot.lane.b32.xlu0 %v74, 3
  %v1674 = vpop.permute.xlu0 %1673
  %v1739 = vsub.f32 %v75, %v1548
  %v1740 = vsub.f32 %v76, %v1550
  %v1741 = vsub.f32 %v77, %v1552
  %v1742 = vsub.f32 %v78, %v1554
  %v1743 = vsub.f32 %v79, %v1556
  %v1744 = vsub.f32 %v80, %v1558
  %v1745 = vsub.f32 %v81, %v1560
  %v1746 = vsub.f32 %v82, %v1562
  %v1747 = vsub.f32 %v83, %v1564
  %v1748 = vsub.f32 %v84, %v1566
  %v1749 = vsub.f32 %v85, %v1568
  %v1750 = vsub.f32 %v86, %v1570
  %v1751 = vsub.f32 %v87, %v1572
  %v1752 = vsub.f32 %v88, %v1574
  %v1753 = vsub.f32 %v89, %v1576
  %v1754 = vsub.f32 %v90, %v1578
  %v1755 = vsub.f32 %v91, %v1580
  %v1756 = vsub.f32 %v92, %v1582
  %v1757 = vsub.f32 %v93, %v1584
  %v1758 = vsub.f32 %v94, %v1586
  %v1759 = vsub.f32 %v95, %v1588
  %v1760 = vsub.f32 %v96, %v1590
  %v1761 = vsub.f32 %v97, %v1592
  %v1762 = vsub.f32 %v98, %v1594
  %v1763 = vsub.f32 %v99, %v1596
  %v1764 = vsub.f32 %v100, %v1598
  %v1765 = vsub.f32 %v101, %v1600
  %v1766 = vsub.f32 %v102, %v1602
  %v1767 = vsub.f32 %v103, %v1604
  %v1768 = vsub.f32 %v104, %v1606
  %v1769 = vsub.f32 %v105, %v1608
  %v1770 = vsub.f32 %v106, %v1610
  %v1771 = vsub.f32 %v107, %v1612
  %v1772 = vsub.f32 %v108, %v1614
  %v1773 = vsub.f32 %v109, %v1616
  %v1774 = vsub.f32 %v110, %v1618
  %v1775 = vsub.f32 %v111, %v1620
  %v1776 = vsub.f32 %v112, %v1622
  %v1777 = vsub.f32 %v113, %v1624
  %v1778 = vsub.f32 %v114, %v1626
  %v1779 = vsub.f32 %v115, %v1628
  %v1780 = vsub.f32 %v116, %v1630
  %v1781 = vsub.f32 %v117, %v1632
  %v1782 = vsub.f32 %v118, %v1634
  %v1783 = vsub.f32 %v119, %v1636
  %v1784 = vsub.f32 %v120, %v1638
  %v1785 = vsub.f32 %v121, %v1640
  %v1786 = vsub.f32 %v122, %v1642
  %v1787 = vsub.f32 %v123, %v1644
  %v1788 = vsub.f32 %v124, %v1646
  %v1789 = vsub.f32 %v125, %v1648
  %v1790 = vsub.f32 %v126, %v1650
  %v1791 = vsub.f32 %v127, %v1652
  %v1792 = vsub.f32 %v128, %v1654
  %v1793 = vsub.f32 %v129, %v1656
  %v1794 = vsub.f32 %v130, %v1658
  %v1795 = vsub.f32 %v131, %v1660
  %v1796 = vsub.f32 %v132, %v1662
  %v1797 = vsub.f32 %v133, %v1664
  %v1798 = vsub.f32 %v134, %v1666
  %v1799 = vsub.f32 %v135, %v1668
  %v1800 = vsub.f32 %v136, %v1670
  %v1801 = vsub.f32 %v137, %v1672
  %v1802 = vsub.f32 %v138, %v1674
  %1803 = vrot.lane.b32.xlu0 %v75, 2
  %v1804 = vpop.permute.xlu0 %1803
  %1805 = vrot.lane.b32.xlu0 %v76, 2
  %v1806 = vpop.permute.xlu0 %1805
  %1807 = vrot.lane.b32.xlu0 %v77, 2
  %v1808 = vpop.permute.xlu0 %1807
  %1809 = vrot.lane.b32.xlu0 %v78, 2
  %v1810 = vpop.permute.xlu0 %1809
  %1811 = vrot.lane.b32.xlu0 %v79, 2
  %v1812 = vpop.permute.xlu0 %1811
  %1813 = vrot.lane.b32.xlu0 %v80, 2
  %v1814 = vpop.permute.xlu0 %1813
  %1815 = vrot.lane.b32.xlu0 %v81, 2
  %v1816 = vpop.permute.xlu0 %1815
  %1817 = vrot.lane.b32.xlu0 %v82, 2
  %v1818 = vpop.permute.xlu0 %1817
  %1819 = vrot.lane.b32.xlu0 %v83, 2
  %v1820 = vpop.permute.xlu0 %1819
  %1821 = vrot.lane.b32.xlu0 %v84, 2
  %v1822 = vpop.permute.xlu0 %1821
  %1823 = vrot.lane.b32.xlu0 %v85, 2
  %v1824 = vpop.permute.xlu0 %1823
  %1825 = vrot.lane.b32.xlu0 %v86, 2
  %v1826 = vpop.permute.xlu0 %1825
  %1827 = vrot.lane.b32.xlu0 %v87, 2
  %v1828 = vpop.permute.xlu0 %1827
  %1829 = vrot.lane.b32.xlu0 %v88, 2
  %v1830 = vpop.permute.xlu0 %1829
  %1831 = vrot.lane.b32.xlu0 %v89, 2
  %v1832 = vpop.permute.xlu0 %1831
  %1833 = vrot.lane.b32.xlu0 %v90, 2
  %v1834 = vpop.permute.xlu0 %1833
  %1835 = vrot.lane.b32.xlu0 %v91, 2
  %v1836 = vpop.permute.xlu0 %1835
  %1837 = vrot.lane.b32.xlu0 %v92, 2
  %v1838 = vpop.permute.xlu0 %1837
  %1839 = vrot.lane.b32.xlu0 %v93, 2
  %v1840 = vpop.permute.xlu0 %1839
  %1841 = vrot.lane.b32.xlu0 %v94, 2
  %v1842 = vpop.permute.xlu0 %1841
  %1843 = vrot.lane.b32.xlu0 %v95, 2
  %v1844 = vpop.permute.xlu0 %1843
  %1845 = vrot.lane.b32.xlu0 %v96, 2
  %v1846 = vpop.permute.xlu0 %1845
  %1847 = vrot.lane.b32.xlu0 %v97, 2
  %v1848 = vpop.permute.xlu0 %1847
  %1849 = vrot.lane.b32.xlu0 %v98, 2
  %v1850 = vpop.permute.xlu0 %1849
  %1851 = vrot.lane.b32.xlu0 %v99, 2
  %v1852 = vpop.permute.xlu0 %1851
  %1853 = vrot.lane.b32.xlu0 %v100, 2
  %v1854 = vpop.permute.xlu0 %1853
  %1855 = vrot.lane.b32.xlu0 %v101, 2
  %v1856 = vpop.permute.xlu0 %1855
  %1857 = vrot.lane.b32.xlu0 %v102, 2
  %v1858 = vpop.permute.xlu0 %1857
  %1859 = vrot.lane.b32.xlu0 %v103, 2
  %v1860 = vpop.permute.xlu0 %1859
  %1861 = vrot.lane.b32.xlu0 %v104, 2
  %v1862 = vpop.permute.xlu0 %1861
  %1863 = vrot.lane.b32.xlu0 %v105, 2
  %v1864 = vpop.permute.xlu0 %1863
  %1865 = vrot.lane.b32.xlu0 %v106, 2
  %v1866 = vpop.permute.xlu0 %1865
  %1867 = vrot.lane.b32.xlu0 %v107, 2
  %v1868 = vpop.permute.xlu0 %1867
  %1869 = vrot.lane.b32.xlu0 %v108, 2
  %v1870 = vpop.permute.xlu0 %1869
  %1871 = vrot.lane.b32.xlu0 %v109, 2
  %v1872 = vpop.permute.xlu0 %1871
  %1873 = vrot.lane.b32.xlu0 %v110, 2
  %v1874 = vpop.permute.xlu0 %1873
  %1875 = vrot.lane.b32.xlu0 %v111, 2
  %v1876 = vpop.permute.xlu0 %1875
  %1877 = vrot.lane.b32.xlu0 %v112, 2
  %v1878 = vpop.permute.xlu0 %1877
  %1879 = vrot.lane.b32.xlu0 %v113, 2
  %v1880 = vpop.permute.xlu0 %1879
  %1881 = vrot.lane.b32.xlu0 %v114, 2
  %v1882 = vpop.permute.xlu0 %1881
  %1883 = vrot.lane.b32.xlu0 %v115, 2
  %v1884 = vpop.permute.xlu0 %1883
  %1885 = vrot.lane.b32.xlu0 %v116, 2
  %v1886 = vpop.permute.xlu0 %1885
  %1887 = vrot.lane.b32.xlu0 %v117, 2
  %v1888 = vpop.permute.xlu0 %1887
  %1889 = vrot.lane.b32.xlu0 %v118, 2
  %v1890 = vpop.permute.xlu0 %1889
  %1891 = vrot.lane.b32.xlu0 %v119, 2
  %v1892 = vpop.permute.xlu0 %1891
  %1893 = vrot.lane.b32.xlu0 %v120, 2
  %v1894 = vpop.permute.xlu0 %1893
  %1895 = vrot.lane.b32.xlu0 %v121, 2
  %v1896 = vpop.permute.xlu0 %1895
  %1897 = vrot.lane.b32.xlu0 %v122, 2
  %v1898 = vpop.permute.xlu0 %1897
  %1899 = vrot.lane.b32.xlu0 %v123, 2
  %v1900 = vpop.permute.xlu0 %1899
  %1901 = vrot.lane.b32.xlu0 %v124, 2
  %v1902 = vpop.permute.xlu0 %1901
  %1903 = vrot.lane.b32.xlu0 %v125, 2
  %v1904 = vpop.permute.xlu0 %1903
  %1905 = vrot.lane.b32.xlu0 %v126, 2
  %v1906 = vpop.permute.xlu0 %1905
  %1907 = vrot.lane.b32.xlu0 %v127, 2
  %v1908 = vpop.permute.xlu0 %1907
  %1909 = vrot.lane.b32.xlu0 %v128, 2
  %v1910 = vpop.permute.xlu0 %1909
  %1911 = vrot.lane.b32.xlu0 %v129, 2
  %v1912 = vpop.permute.xlu0 %1911
  %1913 = vrot.lane.b32.xlu0 %v130, 2
  %v1914 = vpop.permute.xlu0 %1913
  %1915 = vrot.lane.b32.xlu0 %v131, 2
  %v1916 = vpop.permute.xlu0 %1915
  %1917 = vrot.lane.b32.xlu0 %v132, 2
  %v1918 = vpop.permute.xlu0 %1917
  %1919 = vrot.lane.b32.xlu0 %v133, 2
  %v1920 = vpop.permute.xlu0 %1919
  %1921 = vrot.lane.b32.xlu0 %v134, 2
  %v1922 = vpop.permute.xlu0 %1921
  %1923 = vrot.lane.b32.xlu0 %v135, 2
  %v1924 = vpop.permute.xlu0 %1923
  %1925 = vrot.lane.b32.xlu0 %v136, 2
  %v1926 = vpop.permute.xlu0 %1925
  %1927 = vrot.lane.b32.xlu0 %v137, 2
  %v1928 = vpop.permute.xlu0 %1927
  %1929 = vrot.lane.b32.xlu0 %v138, 2
  %v1930 = vpop.permute.xlu0 %1929
  %v1995 = vadd.f32 %v1739, %v1804
  %v1996 = vadd.f32 %v1740, %v1806
  %v1997 = vadd.f32 %v1741, %v1808
  %v1998 = vadd.f32 %v1742, %v1810
  %v1999 = vadd.f32 %v1743, %v1812
  %v2000 = vadd.f32 %v1744, %v1814
  %v2001 = vadd.f32 %v1745, %v1816
  %v2002 = vadd.f32 %v1746, %v1818
  %v2003 = vadd.f32 %v1747, %v1820
  %v2004 = vadd.f32 %v1748, %v1822
  %v2005 = vadd.f32 %v1749, %v1824
  %v2006 = vadd.f32 %v1750, %v1826
  %v2007 = vadd.f32 %v1751, %v1828
  %v2008 = vadd.f32 %v1752, %v1830
  %v2009 = vadd.f32 %v1753, %v1832
  %v2010 = vadd.f32 %v1754, %v1834
  %v2011 = vadd.f32 %v1755, %v1836
  %v2012 = vadd.f32 %v1756, %v1838
  %v2013 = vadd.f32 %v1757, %v1840
  %v2014 = vadd.f32 %v1758, %v1842
  %v2015 = vadd.f32 %v1759, %v1844
  %v2016 = vadd.f32 %v1760, %v1846
  %v2017 = vadd.f32 %v1761, %v1848
  %v2018 = vadd.f32 %v1762, %v1850
  %v2019 = vadd.f32 %v1763, %v1852
  %v2020 = vadd.f32 %v1764, %v1854
  %v2021 = vadd.f32 %v1765, %v1856
  %v2022 = vadd.f32 %v1766, %v1858
  %v2023 = vadd.f32 %v1767, %v1860
  %v2024 = vadd.f32 %v1768, %v1862
  %v2025 = vadd.f32 %v1769, %v1864
  %v2026 = vadd.f32 %v1770, %v1866
  %v2027 = vadd.f32 %v1771, %v1868
  %v2028 = vadd.f32 %v1772, %v1870
  %v2029 = vadd.f32 %v1773, %v1872
  %v2030 = vadd.f32 %v1774, %v1874
  %v2031 = vadd.f32 %v1775, %v1876
  %v2032 = vadd.f32 %v1776, %v1878
  %v2033 = vadd.f32 %v1777, %v1880
  %v2034 = vadd.f32 %v1778, %v1882
  %v2035 = vadd.f32 %v1779, %v1884
  %v2036 = vadd.f32 %v1780, %v1886
  %v2037 = vadd.f32 %v1781, %v1888
  %v2038 = vadd.f32 %v1782, %v1890
  %v2039 = vadd.f32 %v1783, %v1892
  %v2040 = vadd.f32 %v1784, %v1894
  %v2041 = vadd.f32 %v1785, %v1896
  %v2042 = vadd.f32 %v1786, %v1898
  %v2043 = vadd.f32 %v1787, %v1900
  %v2044 = vadd.f32 %v1788, %v1902
  %v2045 = vadd.f32 %v1789, %v1904
  %v2046 = vadd.f32 %v1790, %v1906
  %v2047 = vadd.f32 %v1791, %v1908
  %v2048 = vadd.f32 %v1792, %v1910
  %v2049 = vadd.f32 %v1793, %v1912
  %v2050 = vadd.f32 %v1794, %v1914
  %v2051 = vadd.f32 %v1795, %v1916
  %v2052 = vadd.f32 %v1796, %v1918
  %v2053 = vadd.f32 %v1797, %v1920
  %v2054 = vadd.f32 %v1798, %v1922
  %v2055 = vadd.f32 %v1799, %v1924
  %v2056 = vadd.f32 %v1800, %v1926
  %v2057 = vadd.f32 %v1801, %v1928
  %v2058 = vadd.f32 %v1802, %v1930
  %vm2059 = vcmp.gt.f32.partialorder %v1995, 3.1415927
  %vm2060 = vcmp.gt.f32.partialorder %v1996, 3.1415927
  %vm2061 = vcmp.gt.f32.partialorder %v1997, 3.1415927
  %vm2062 = vcmp.gt.f32.partialorder %v1998, 3.1415927
  %vm2063 = vcmp.gt.f32.partialorder %v1999, 3.1415927
  %vm2064 = vcmp.gt.f32.partialorder %v2000, 3.1415927
  %vm2065 = vcmp.gt.f32.partialorder %v2001, 3.1415927
  %vm2066 = vcmp.gt.f32.partialorder %v2002, 3.1415927
  %vm2067 = vcmp.gt.f32.partialorder %v2003, 3.1415927
  %vm2068 = vcmp.gt.f32.partialorder %v2004, 3.1415927
  %vm2069 = vcmp.gt.f32.partialorder %v2005, 3.1415927
  %vm2070 = vcmp.gt.f32.partialorder %v2006, 3.1415927
  %vm2071 = vcmp.gt.f32.partialorder %v2007, 3.1415927
  %vm2072 = vcmp.gt.f32.partialorder %v2008, 3.1415927
  %vm2073 = vcmp.gt.f32.partialorder %v2009, 3.1415927
  %vm2074 = vcmp.gt.f32.partialorder %v2010, 3.1415927
  %vm2075 = vcmp.gt.f32.partialorder %v2011, 3.1415927
  %vm2076 = vcmp.gt.f32.partialorder %v2012, 3.1415927
  %vm2077 = vcmp.gt.f32.partialorder %v2013, 3.1415927
  %vm2078 = vcmp.gt.f32.partialorder %v2014, 3.1415927
  %vm2079 = vcmp.gt.f32.partialorder %v2015, 3.1415927
  %vm2080 = vcmp.gt.f32.partialorder %v2016, 3.1415927
  %vm2081 = vcmp.gt.f32.partialorder %v2017, 3.1415927
  %vm2082 = vcmp.gt.f32.partialorder %v2018, 3.1415927
  %vm2083 = vcmp.gt.f32.partialorder %v2019, 3.1415927
  %vm2084 = vcmp.gt.f32.partialorder %v2020, 3.1415927
  %vm2085 = vcmp.gt.f32.partialorder %v2021, 3.1415927
  %vm2086 = vcmp.gt.f32.partialorder %v2022, 3.1415927
  %vm2087 = vcmp.gt.f32.partialorder %v2023, 3.1415927
  %vm2088 = vcmp.gt.f32.partialorder %v2024, 3.1415927
  %vm2089 = vcmp.gt.f32.partialorder %v2025, 3.1415927
  %vm2090 = vcmp.gt.f32.partialorder %v2026, 3.1415927
  %vm2091 = vcmp.gt.f32.partialorder %v2027, 3.1415927
  %vm2092 = vcmp.gt.f32.partialorder %v2028, 3.1415927
  %vm2093 = vcmp.gt.f32.partialorder %v2029, 3.1415927
  %vm2094 = vcmp.gt.f32.partialorder %v2030, 3.1415927
  %vm2095 = vcmp.gt.f32.partialorder %v2031, 3.1415927
  %vm2096 = vcmp.gt.f32.partialorder %v2032, 3.1415927
  %vm2097 = vcmp.gt.f32.partialorder %v2033, 3.1415927
  %vm2098 = vcmp.gt.f32.partialorder %v2034, 3.1415927
  %vm2099 = vcmp.gt.f32.partialorder %v2035, 3.1415927
  %vm2100 = vcmp.gt.f32.partialorder %v2036, 3.1415927
  %vm2101 = vcmp.gt.f32.partialorder %v2037, 3.1415927
  %vm2102 = vcmp.gt.f32.partialorder %v2038, 3.1415927
  %vm2103 = vcmp.gt.f32.partialorder %v2039, 3.1415927
  %vm2104 = vcmp.gt.f32.partialorder %v2040, 3.1415927
  %vm2105 = vcmp.gt.f32.partialorder %v2041, 3.1415927
  %vm2106 = vcmp.gt.f32.partialorder %v2042, 3.1415927
  %vm2107 = vcmp.gt.f32.partialorder %v2043, 3.1415927
  %vm2108 = vcmp.gt.f32.partialorder %v2044, 3.1415927
  %vm2109 = vcmp.gt.f32.partialorder %v2045, 3.1415927
  %vm2110 = vcmp.gt.f32.partialorder %v2046, 3.1415927
  %vm2111 = vcmp.gt.f32.partialorder %v2047, 3.1415927
  %vm2112 = vcmp.gt.f32.partialorder %v2048, 3.1415927
  %vm2113 = vcmp.gt.f32.partialorder %v2049, 3.1415927
  %vm2114 = vcmp.gt.f32.partialorder %v2050, 3.1415927
  %vm2115 = vcmp.gt.f32.partialorder %v2051, 3.1415927
  %vm2116 = vcmp.gt.f32.partialorder %v2052, 3.1415927
  %vm2117 = vcmp.gt.f32.partialorder %v2053, 3.1415927
  %vm2118 = vcmp.gt.f32.partialorder %v2054, 3.1415927
  %vm2119 = vcmp.gt.f32.partialorder %v2055, 3.1415927
  %vm2120 = vcmp.gt.f32.partialorder %v2056, 3.1415927
  %vm2121 = vcmp.gt.f32.partialorder %v2057, 3.1415927
  %vm2122 = vcmp.gt.f32.partialorder %v2058, 3.1415927
  %v2123 = vsub.f32 %v1995, 6.2831855
  %v2124 = vsub.f32 %v1996, 6.2831855
  %v2125 = vsub.f32 %v1997, 6.2831855
  %v2126 = vsub.f32 %v1998, 6.2831855
  %v2127 = vsub.f32 %v1999, 6.2831855
  %v2128 = vsub.f32 %v2000, 6.2831855
  %v2129 = vsub.f32 %v2001, 6.2831855
  %v2130 = vsub.f32 %v2002, 6.2831855
  %v2131 = vsub.f32 %v2003, 6.2831855
  %v2132 = vsub.f32 %v2004, 6.2831855
  %v2133 = vsub.f32 %v2005, 6.2831855
  %v2134 = vsub.f32 %v2006, 6.2831855
  %v2135 = vsub.f32 %v2007, 6.2831855
  %v2136 = vsub.f32 %v2008, 6.2831855
  %v2137 = vsub.f32 %v2009, 6.2831855
  %v2138 = vsub.f32 %v2010, 6.2831855
  %v2139 = vsub.f32 %v2011, 6.2831855
  %v2140 = vsub.f32 %v2012, 6.2831855
  %v2141 = vsub.f32 %v2013, 6.2831855
  %v2142 = vsub.f32 %v2014, 6.2831855
  %v2143 = vsub.f32 %v2015, 6.2831855
  %v2144 = vsub.f32 %v2016, 6.2831855
  %v2145 = vsub.f32 %v2017, 6.2831855
  %v2146 = vsub.f32 %v2018, 6.2831855
  %v2147 = vsub.f32 %v2019, 6.2831855
  %v2148 = vsub.f32 %v2020, 6.2831855
  %v2149 = vsub.f32 %v2021, 6.2831855
  %v2150 = vsub.f32 %v2022, 6.2831855
  %v2151 = vsub.f32 %v2023, 6.2831855
  %v2152 = vsub.f32 %v2024, 6.2831855
  %v2153 = vsub.f32 %v2025, 6.2831855
  %v2154 = vsub.f32 %v2026, 6.2831855
  %v2155 = vsub.f32 %v2027, 6.2831855
  %v2156 = vsub.f32 %v2028, 6.2831855
  %v2157 = vsub.f32 %v2029, 6.2831855
  %v2158 = vsub.f32 %v2030, 6.2831855
  %v2159 = vsub.f32 %v2031, 6.2831855
  %v2160 = vsub.f32 %v2032, 6.2831855
  %v2161 = vsub.f32 %v2033, 6.2831855
  %v2162 = vsub.f32 %v2034, 6.2831855
  %v2163 = vsub.f32 %v2035, 6.2831855
  %v2164 = vsub.f32 %v2036, 6.2831855
  %v2165 = vsub.f32 %v2037, 6.2831855
  %v2166 = vsub.f32 %v2038, 6.2831855
  %v2167 = vsub.f32 %v2039, 6.2831855
  %v2168 = vsub.f32 %v2040, 6.2831855
  %v2169 = vsub.f32 %v2041, 6.2831855
  %v2170 = vsub.f32 %v2042, 6.2831855
  %v2171 = vsub.f32 %v2043, 6.2831855
  %v2172 = vsub.f32 %v2044, 6.2831855
  %v2173 = vsub.f32 %v2045, 6.2831855
  %v2174 = vsub.f32 %v2046, 6.2831855
  %v2175 = vsub.f32 %v2047, 6.2831855
  %v2176 = vsub.f32 %v2048, 6.2831855
  %v2177 = vsub.f32 %v2049, 6.2831855
  %v2178 = vsub.f32 %v2050, 6.2831855
  %v2179 = vsub.f32 %v2051, 6.2831855
  %v2180 = vsub.f32 %v2052, 6.2831855
  %v2181 = vsub.f32 %v2053, 6.2831855
  %v2182 = vsub.f32 %v2054, 6.2831855
  %v2183 = vsub.f32 %v2055, 6.2831855
  %v2184 = vsub.f32 %v2056, 6.2831855
  %v2185 = vsub.f32 %v2057, 6.2831855
  %v2186 = vsub.f32 %v2058, 6.2831855
  %v2187 = vsel %vm2059, %v2123, %v1995
  %v2188 = vsel %vm2060, %v2124, %v1996
  %v2189 = vsel %vm2061, %v2125, %v1997
  %v2190 = vsel %vm2062, %v2126, %v1998
  %v2191 = vsel %vm2063, %v2127, %v1999
  %v2192 = vsel %vm2064, %v2128, %v2000
  %v2193 = vsel %vm2065, %v2129, %v2001
  %v2194 = vsel %vm2066, %v2130, %v2002
  %v2195 = vsel %vm2067, %v2131, %v2003
  %v2196 = vsel %vm2068, %v2132, %v2004
  %v2197 = vsel %vm2069, %v2133, %v2005
  %v2198 = vsel %vm2070, %v2134, %v2006
  %v2199 = vsel %vm2071, %v2135, %v2007
  %v2200 = vsel %vm2072, %v2136, %v2008
  %v2201 = vsel %vm2073, %v2137, %v2009
  %v2202 = vsel %vm2074, %v2138, %v2010
  %v2203 = vsel %vm2075, %v2139, %v2011
  %v2204 = vsel %vm2076, %v2140, %v2012
  %v2205 = vsel %vm2077, %v2141, %v2013
  %v2206 = vsel %vm2078, %v2142, %v2014
  %v2207 = vsel %vm2079, %v2143, %v2015
  %v2208 = vsel %vm2080, %v2144, %v2016
  %v2209 = vsel %vm2081, %v2145, %v2017
  %v2210 = vsel %vm2082, %v2146, %v2018
  %v2211 = vsel %vm2083, %v2147, %v2019
  %v2212 = vsel %vm2084, %v2148, %v2020
  %v2213 = vsel %vm2085, %v2149, %v2021
  %v2214 = vsel %vm2086, %v2150, %v2022
  %v2215 = vsel %vm2087, %v2151, %v2023
  %v2216 = vsel %vm2088, %v2152, %v2024
  %v2217 = vsel %vm2089, %v2153, %v2025
  %v2218 = vsel %vm2090, %v2154, %v2026
  %v2219 = vsel %vm2091, %v2155, %v2027
  %v2220 = vsel %vm2092, %v2156, %v2028
  %v2221 = vsel %vm2093, %v2157, %v2029
  %v2222 = vsel %vm2094, %v2158, %v2030
  %v2223 = vsel %vm2095, %v2159, %v2031
  %v2224 = vsel %vm2096, %v2160, %v2032
  %v2225 = vsel %vm2097, %v2161, %v2033
  %v2226 = vsel %vm2098, %v2162, %v2034
  %v2227 = vsel %vm2099, %v2163, %v2035
  %v2228 = vsel %vm2100, %v2164, %v2036
  %v2229 = vsel %vm2101, %v2165, %v2037
  %v2230 = vsel %vm2102, %v2166, %v2038
  %v2231 = vsel %vm2103, %v2167, %v2039
  %v2232 = vsel %vm2104, %v2168, %v2040
  %v2233 = vsel %vm2105, %v2169, %v2041
  %v2234 = vsel %vm2106, %v2170, %v2042
  %v2235 = vsel %vm2107, %v2171, %v2043
  %v2236 = vsel %vm2108, %v2172, %v2044
  %v2237 = vsel %vm2109, %v2173, %v2045
  %v2238 = vsel %vm2110, %v2174, %v2046
  %v2239 = vsel %vm2111, %v2175, %v2047
  %v2240 = vsel %vm2112, %v2176, %v2048
  %v2241 = vsel %vm2113, %v2177, %v2049
  %v2242 = vsel %vm2114, %v2178, %v2050
  %v2243 = vsel %vm2115, %v2179, %v2051
  %v2244 = vsel %vm2116, %v2180, %v2052
  %v2245 = vsel %vm2117, %v2181, %v2053
  %v2246 = vsel %vm2118, %v2182, %v2054
  %v2247 = vsel %vm2119, %v2183, %v2055
  %v2248 = vsel %vm2120, %v2184, %v2056
  %v2249 = vsel %vm2121, %v2185, %v2057
  %v2250 = vsel %vm2122, %v2186, %v2058
  %vm2251 = vcmp.lt.f32.partialorder %v2187, -3.1415927
  %vm2252 = vcmp.lt.f32.partialorder %v2188, -3.1415927
  %vm2253 = vcmp.lt.f32.partialorder %v2189, -3.1415927
  %vm2254 = vcmp.lt.f32.partialorder %v2190, -3.1415927
  %vm2255 = vcmp.lt.f32.partialorder %v2191, -3.1415927
  %vm2256 = vcmp.lt.f32.partialorder %v2192, -3.1415927
  %vm2257 = vcmp.lt.f32.partialorder %v2193, -3.1415927
  %vm2258 = vcmp.lt.f32.partialorder %v2194, -3.1415927
  %vm2259 = vcmp.lt.f32.partialorder %v2195, -3.1415927
  %vm2260 = vcmp.lt.f32.partialorder %v2196, -3.1415927
  %vm2261 = vcmp.lt.f32.partialorder %v2197, -3.1415927
  %vm2262 = vcmp.lt.f32.partialorder %v2198, -3.1415927
  %vm2263 = vcmp.lt.f32.partialorder %v2199, -3.1415927
  %vm2264 = vcmp.lt.f32.partialorder %v2200, -3.1415927
  %vm2265 = vcmp.lt.f32.partialorder %v2201, -3.1415927
  %vm2266 = vcmp.lt.f32.partialorder %v2202, -3.1415927
  %vm2267 = vcmp.lt.f32.partialorder %v2203, -3.1415927
  %vm2268 = vcmp.lt.f32.partialorder %v2204, -3.1415927
  %vm2269 = vcmp.lt.f32.partialorder %v2205, -3.1415927
  %vm2270 = vcmp.lt.f32.partialorder %v2206, -3.1415927
  %vm2271 = vcmp.lt.f32.partialorder %v2207, -3.1415927
  %vm2272 = vcmp.lt.f32.partialorder %v2208, -3.1415927
  %vm2273 = vcmp.lt.f32.partialorder %v2209, -3.1415927
  %vm2274 = vcmp.lt.f32.partialorder %v2210, -3.1415927
  %vm2275 = vcmp.lt.f32.partialorder %v2211, -3.1415927
  %vm2276 = vcmp.lt.f32.partialorder %v2212, -3.1415927
  %vm2277 = vcmp.lt.f32.partialorder %v2213, -3.1415927
  %vm2278 = vcmp.lt.f32.partialorder %v2214, -3.1415927
  %vm2279 = vcmp.lt.f32.partialorder %v2215, -3.1415927
  %vm2280 = vcmp.lt.f32.partialorder %v2216, -3.1415927
  %vm2281 = vcmp.lt.f32.partialorder %v2217, -3.1415927
  %vm2282 = vcmp.lt.f32.partialorder %v2218, -3.1415927
  %vm2283 = vcmp.lt.f32.partialorder %v2219, -3.1415927
  %vm2284 = vcmp.lt.f32.partialorder %v2220, -3.1415927
  %vm2285 = vcmp.lt.f32.partialorder %v2221, -3.1415927
  %vm2286 = vcmp.lt.f32.partialorder %v2222, -3.1415927
  %vm2287 = vcmp.lt.f32.partialorder %v2223, -3.1415927
  %vm2288 = vcmp.lt.f32.partialorder %v2224, -3.1415927
  %vm2289 = vcmp.lt.f32.partialorder %v2225, -3.1415927
  %vm2290 = vcmp.lt.f32.partialorder %v2226, -3.1415927
  %vm2291 = vcmp.lt.f32.partialorder %v2227, -3.1415927
  %vm2292 = vcmp.lt.f32.partialorder %v2228, -3.1415927
  %vm2293 = vcmp.lt.f32.partialorder %v2229, -3.1415927
  %vm2294 = vcmp.lt.f32.partialorder %v2230, -3.1415927
  %vm2295 = vcmp.lt.f32.partialorder %v2231, -3.1415927
  %vm2296 = vcmp.lt.f32.partialorder %v2232, -3.1415927
  %vm2297 = vcmp.lt.f32.partialorder %v2233, -3.1415927
  %vm2298 = vcmp.lt.f32.partialorder %v2234, -3.1415927
  %vm2299 = vcmp.lt.f32.partialorder %v2235, -3.1415927
  %vm2300 = vcmp.lt.f32.partialorder %v2236, -3.1415927
  %vm2301 = vcmp.lt.f32.partialorder %v2237, -3.1415927
  %vm2302 = vcmp.lt.f32.partialorder %v2238, -3.1415927
  %vm2303 = vcmp.lt.f32.partialorder %v2239, -3.1415927
  %vm2304 = vcmp.lt.f32.partialorder %v2240, -3.1415927
  %vm2305 = vcmp.lt.f32.partialorder %v2241, -3.1415927
  %vm2306 = vcmp.lt.f32.partialorder %v2242, -3.1415927
  %vm2307 = vcmp.lt.f32.partialorder %v2243, -3.1415927
  %vm2308 = vcmp.lt.f32.partialorder %v2244, -3.1415927
  %vm2309 = vcmp.lt.f32.partialorder %v2245, -3.1415927
  %vm2310 = vcmp.lt.f32.partialorder %v2246, -3.1415927
  %vm2311 = vcmp.lt.f32.partialorder %v2247, -3.1415927
  %vm2312 = vcmp.lt.f32.partialorder %v2248, -3.1415927
  %vm2313 = vcmp.lt.f32.partialorder %v2249, -3.1415927
  %vm2314 = vcmp.lt.f32.partialorder %v2250, -3.1415927
  %v2315 = vadd.f32 %v2187, 6.2831855
  %v2316 = vadd.f32 %v2188, 6.2831855
  %v2317 = vadd.f32 %v2189, 6.2831855
  %v2318 = vadd.f32 %v2190, 6.2831855
  %v2319 = vadd.f32 %v2191, 6.2831855
  %v2320 = vadd.f32 %v2192, 6.2831855
  %v2321 = vadd.f32 %v2193, 6.2831855
  %v2322 = vadd.f32 %v2194, 6.2831855
  %v2323 = vadd.f32 %v2195, 6.2831855
  %v2324 = vadd.f32 %v2196, 6.2831855
  %v2325 = vadd.f32 %v2197, 6.2831855
  %v2326 = vadd.f32 %v2198, 6.2831855
  %v2327 = vadd.f32 %v2199, 6.2831855
  %v2328 = vadd.f32 %v2200, 6.2831855
  %v2329 = vadd.f32 %v2201, 6.2831855
  %v2330 = vadd.f32 %v2202, 6.2831855
  %v2331 = vadd.f32 %v2203, 6.2831855
  %v2332 = vadd.f32 %v2204, 6.2831855
  %v2333 = vadd.f32 %v2205, 6.2831855
  %v2334 = vadd.f32 %v2206, 6.2831855
  %v2335 = vadd.f32 %v2207, 6.2831855
  %v2336 = vadd.f32 %v2208, 6.2831855
  %v2337 = vadd.f32 %v2209, 6.2831855
  %v2338 = vadd.f32 %v2210, 6.2831855
  %v2339 = vadd.f32 %v2211, 6.2831855
  %v2340 = vadd.f32 %v2212, 6.2831855
  %v2341 = vadd.f32 %v2213, 6.2831855
  %v2342 = vadd.f32 %v2214, 6.2831855
  %v2343 = vadd.f32 %v2215, 6.2831855
  %v2344 = vadd.f32 %v2216, 6.2831855
  %v2345 = vadd.f32 %v2217, 6.2831855
  %v2346 = vadd.f32 %v2218, 6.2831855
  %v2347 = vadd.f32 %v2219, 6.2831855
  %v2348 = vadd.f32 %v2220, 6.2831855
  %v2349 = vadd.f32 %v2221, 6.2831855
  %v2350 = vadd.f32 %v2222, 6.2831855
  %v2351 = vadd.f32 %v2223, 6.2831855
  %v2352 = vadd.f32 %v2224, 6.2831855
  %v2353 = vadd.f32 %v2225, 6.2831855
  %v2354 = vadd.f32 %v2226, 6.2831855
  %v2355 = vadd.f32 %v2227, 6.2831855
  %v2356 = vadd.f32 %v2228, 6.2831855
  %v2357 = vadd.f32 %v2229, 6.2831855
  %v2358 = vadd.f32 %v2230, 6.2831855
  %v2359 = vadd.f32 %v2231, 6.2831855
  %v2360 = vadd.f32 %v2232, 6.2831855
  %v2361 = vadd.f32 %v2233, 6.2831855
  %v2362 = vadd.f32 %v2234, 6.2831855
  %v2363 = vadd.f32 %v2235, 6.2831855
  %v2364 = vadd.f32 %v2236, 6.2831855
  %v2365 = vadd.f32 %v2237, 6.2831855
  %v2366 = vadd.f32 %v2238, 6.2831855
  %v2367 = vadd.f32 %v2239, 6.2831855
  %v2368 = vadd.f32 %v2240, 6.2831855
  %v2369 = vadd.f32 %v2241, 6.2831855
  %v2370 = vadd.f32 %v2242, 6.2831855
  %v2371 = vadd.f32 %v2243, 6.2831855
  %v2372 = vadd.f32 %v2244, 6.2831855
  %v2373 = vadd.f32 %v2245, 6.2831855
  %v2374 = vadd.f32 %v2246, 6.2831855
  %v2375 = vadd.f32 %v2247, 6.2831855
  %v2376 = vadd.f32 %v2248, 6.2831855
  %v2377 = vadd.f32 %v2249, 6.2831855
  %v2378 = vadd.f32 %v2250, 6.2831855
  %v2379 = vsel %vm2251, %v2315, %v2187
  %v2380 = vsel %vm2252, %v2316, %v2188
  %v2381 = vsel %vm2253, %v2317, %v2189
  %v2382 = vsel %vm2254, %v2318, %v2190
  %v2383 = vsel %vm2255, %v2319, %v2191
  %v2384 = vsel %vm2256, %v2320, %v2192
  %v2385 = vsel %vm2257, %v2321, %v2193
  %v2386 = vsel %vm2258, %v2322, %v2194
  %v2387 = vsel %vm2259, %v2323, %v2195
  %v2388 = vsel %vm2260, %v2324, %v2196
  %v2389 = vsel %vm2261, %v2325, %v2197
  %v2390 = vsel %vm2262, %v2326, %v2198
  %v2391 = vsel %vm2263, %v2327, %v2199
  %v2392 = vsel %vm2264, %v2328, %v2200
  %v2393 = vsel %vm2265, %v2329, %v2201
  %v2394 = vsel %vm2266, %v2330, %v2202
  %v2395 = vsel %vm2267, %v2331, %v2203
  %v2396 = vsel %vm2268, %v2332, %v2204
  %v2397 = vsel %vm2269, %v2333, %v2205
  %v2398 = vsel %vm2270, %v2334, %v2206
  %v2399 = vsel %vm2271, %v2335, %v2207
  %v2400 = vsel %vm2272, %v2336, %v2208
  %v2401 = vsel %vm2273, %v2337, %v2209
  %v2402 = vsel %vm2274, %v2338, %v2210
  %v2403 = vsel %vm2275, %v2339, %v2211
  %v2404 = vsel %vm2276, %v2340, %v2212
  %v2405 = vsel %vm2277, %v2341, %v2213
  %v2406 = vsel %vm2278, %v2342, %v2214
  %v2407 = vsel %vm2279, %v2343, %v2215
  %v2408 = vsel %vm2280, %v2344, %v2216
  %v2409 = vsel %vm2281, %v2345, %v2217
  %v2410 = vsel %vm2282, %v2346, %v2218
  %v2411 = vsel %vm2283, %v2347, %v2219
  %v2412 = vsel %vm2284, %v2348, %v2220
  %v2413 = vsel %vm2285, %v2349, %v2221
  %v2414 = vsel %vm2286, %v2350, %v2222
  %v2415 = vsel %vm2287, %v2351, %v2223
  %v2416 = vsel %vm2288, %v2352, %v2224
  %v2417 = vsel %vm2289, %v2353, %v2225
  %v2418 = vsel %vm2290, %v2354, %v2226
  %v2419 = vsel %vm2291, %v2355, %v2227
  %v2420 = vsel %vm2292, %v2356, %v2228
  %v2421 = vsel %vm2293, %v2357, %v2229
  %v2422 = vsel %vm2294, %v2358, %v2230
  %v2423 = vsel %vm2295, %v2359, %v2231
  %v2424 = vsel %vm2296, %v2360, %v2232
  %v2425 = vsel %vm2297, %v2361, %v2233
  %v2426 = vsel %vm2298, %v2362, %v2234
  %v2427 = vsel %vm2299, %v2363, %v2235
  %v2428 = vsel %vm2300, %v2364, %v2236
  %v2429 = vsel %vm2301, %v2365, %v2237
  %v2430 = vsel %vm2302, %v2366, %v2238
  %v2431 = vsel %vm2303, %v2367, %v2239
  %v2432 = vsel %vm2304, %v2368, %v2240
  %v2433 = vsel %vm2305, %v2369, %v2241
  %v2434 = vsel %vm2306, %v2370, %v2242
  %v2435 = vsel %vm2307, %v2371, %v2243
  %v2436 = vsel %vm2308, %v2372, %v2244
  %v2437 = vsel %vm2309, %v2373, %v2245
  %v2438 = vsel %vm2310, %v2374, %v2246
  %v2439 = vsel %vm2311, %v2375, %v2247
  %v2440 = vsel %vm2312, %v2376, %v2248
  %v2441 = vsel %vm2313, %v2377, %v2249
  %v2442 = vsel %vm2314, %v2378, %v2250
  %2443 = vrot.lane.b32.xlu0 %v75, 1
  %v2444 = vpop.permute.xlu0 %2443
  %2445 = vrot.lane.b32.xlu0 %v76, 1
  %v2446 = vpop.permute.xlu0 %2445
  %2447 = vrot.lane.b32.xlu0 %v77, 1
  %v2448 = vpop.permute.xlu0 %2447
  %2449 = vrot.lane.b32.xlu0 %v78, 1
  %v2450 = vpop.permute.xlu0 %2449
  %2451 = vrot.lane.b32.xlu0 %v79, 1
  %v2452 = vpop.permute.xlu0 %2451
  %2453 = vrot.lane.b32.xlu0 %v80, 1
  %v2454 = vpop.permute.xlu0 %2453
  %2455 = vrot.lane.b32.xlu0 %v81, 1
  %v2456 = vpop.permute.xlu0 %2455
  %2457 = vrot.lane.b32.xlu0 %v82, 1
  %v2458 = vpop.permute.xlu0 %2457
  %2459 = vrot.lane.b32.xlu0 %v83, 1
  %v2460 = vpop.permute.xlu0 %2459
  %2461 = vrot.lane.b32.xlu0 %v84, 1
  %v2462 = vpop.permute.xlu0 %2461
  %2463 = vrot.lane.b32.xlu0 %v85, 1
  %v2464 = vpop.permute.xlu0 %2463
  %2465 = vrot.lane.b32.xlu0 %v86, 1
  %v2466 = vpop.permute.xlu0 %2465
  %2467 = vrot.lane.b32.xlu0 %v87, 1
  %v2468 = vpop.permute.xlu0 %2467
  %2469 = vrot.lane.b32.xlu0 %v88, 1
  %v2470 = vpop.permute.xlu0 %2469
  %2471 = vrot.lane.b32.xlu0 %v89, 1
  %v2472 = vpop.permute.xlu0 %2471
  %2473 = vrot.lane.b32.xlu0 %v90, 1
  %v2474 = vpop.permute.xlu0 %2473
  %2475 = vrot.lane.b32.xlu0 %v91, 1
  %v2476 = vpop.permute.xlu0 %2475
  %2477 = vrot.lane.b32.xlu0 %v92, 1
  %v2478 = vpop.permute.xlu0 %2477
  %2479 = vrot.lane.b32.xlu0 %v93, 1
  %v2480 = vpop.permute.xlu0 %2479
  %2481 = vrot.lane.b32.xlu0 %v94, 1
  %v2482 = vpop.permute.xlu0 %2481
  %2483 = vrot.lane.b32.xlu0 %v95, 1
  %v2484 = vpop.permute.xlu0 %2483
  %2485 = vrot.lane.b32.xlu0 %v96, 1
  %v2486 = vpop.permute.xlu0 %2485
  %2487 = vrot.lane.b32.xlu0 %v97, 1
  %v2488 = vpop.permute.xlu0 %2487
  %2489 = vrot.lane.b32.xlu0 %v98, 1
  %v2490 = vpop.permute.xlu0 %2489
  %2491 = vrot.lane.b32.xlu0 %v99, 1
  %v2492 = vpop.permute.xlu0 %2491
  %2493 = vrot.lane.b32.xlu0 %v100, 1
  %v2494 = vpop.permute.xlu0 %2493
  %2495 = vrot.lane.b32.xlu0 %v101, 1
  %v2496 = vpop.permute.xlu0 %2495
  %2497 = vrot.lane.b32.xlu0 %v102, 1
  %v2498 = vpop.permute.xlu0 %2497
  %2499 = vrot.lane.b32.xlu0 %v103, 1
  %v2500 = vpop.permute.xlu0 %2499
  %2501 = vrot.lane.b32.xlu0 %v104, 1
  %v2502 = vpop.permute.xlu0 %2501
  %2503 = vrot.lane.b32.xlu0 %v105, 1
  %v2504 = vpop.permute.xlu0 %2503
  %2505 = vrot.lane.b32.xlu0 %v106, 1
  %v2506 = vpop.permute.xlu0 %2505
  %2507 = vrot.lane.b32.xlu0 %v107, 1
  %v2508 = vpop.permute.xlu0 %2507
  %2509 = vrot.lane.b32.xlu0 %v108, 1
  %v2510 = vpop.permute.xlu0 %2509
  %2511 = vrot.lane.b32.xlu0 %v109, 1
  %v2512 = vpop.permute.xlu0 %2511
  %2513 = vrot.lane.b32.xlu0 %v110, 1
  %v2514 = vpop.permute.xlu0 %2513
  %2515 = vrot.lane.b32.xlu0 %v111, 1
  %v2516 = vpop.permute.xlu0 %2515
  %2517 = vrot.lane.b32.xlu0 %v112, 1
  %v2518 = vpop.permute.xlu0 %2517
  %2519 = vrot.lane.b32.xlu0 %v113, 1
  %v2520 = vpop.permute.xlu0 %2519
  %2521 = vrot.lane.b32.xlu0 %v114, 1
  %v2522 = vpop.permute.xlu0 %2521
  %2523 = vrot.lane.b32.xlu0 %v115, 1
  %v2524 = vpop.permute.xlu0 %2523
  %2525 = vrot.lane.b32.xlu0 %v116, 1
  %v2526 = vpop.permute.xlu0 %2525
  %2527 = vrot.lane.b32.xlu0 %v117, 1
  %v2528 = vpop.permute.xlu0 %2527
  %2529 = vrot.lane.b32.xlu0 %v118, 1
  %v2530 = vpop.permute.xlu0 %2529
  %2531 = vrot.lane.b32.xlu0 %v119, 1
  %v2532 = vpop.permute.xlu0 %2531
  %2533 = vrot.lane.b32.xlu0 %v120, 1
  %v2534 = vpop.permute.xlu0 %2533
  %2535 = vrot.lane.b32.xlu0 %v121, 1
  %v2536 = vpop.permute.xlu0 %2535
  %2537 = vrot.lane.b32.xlu0 %v122, 1
  %v2538 = vpop.permute.xlu0 %2537
  %2539 = vrot.lane.b32.xlu0 %v123, 1
  %v2540 = vpop.permute.xlu0 %2539
  %2541 = vrot.lane.b32.xlu0 %v124, 1
  %v2542 = vpop.permute.xlu0 %2541
  %2543 = vrot.lane.b32.xlu0 %v125, 1
  %v2544 = vpop.permute.xlu0 %2543
  %2545 = vrot.lane.b32.xlu0 %v126, 1
  %v2546 = vpop.permute.xlu0 %2545
  %2547 = vrot.lane.b32.xlu0 %v127, 1
  %v2548 = vpop.permute.xlu0 %2547
  %2549 = vrot.lane.b32.xlu0 %v128, 1
  %v2550 = vpop.permute.xlu0 %2549
  %2551 = vrot.lane.b32.xlu0 %v129, 1
  %v2552 = vpop.permute.xlu0 %2551
  %2553 = vrot.lane.b32.xlu0 %v130, 1
  %v2554 = vpop.permute.xlu0 %2553
  %2555 = vrot.lane.b32.xlu0 %v131, 1
  %v2556 = vpop.permute.xlu0 %2555
  %2557 = vrot.lane.b32.xlu0 %v132, 1
  %v2558 = vpop.permute.xlu0 %2557
  %2559 = vrot.lane.b32.xlu0 %v133, 1
  %v2560 = vpop.permute.xlu0 %2559
  %2561 = vrot.lane.b32.xlu0 %v134, 1
  %v2562 = vpop.permute.xlu0 %2561
  %2563 = vrot.lane.b32.xlu0 %v135, 1
  %v2564 = vpop.permute.xlu0 %2563
  %2565 = vrot.lane.b32.xlu0 %v136, 1
  %v2566 = vpop.permute.xlu0 %2565
  %2567 = vrot.lane.b32.xlu0 %v137, 1
  %v2568 = vpop.permute.xlu0 %2567
  %2569 = vrot.lane.b32.xlu0 %v138, 1
  %v2570 = vpop.permute.xlu0 %2569
  %v2635 = vmul.f32 %v2379, %v2444
  %v2636 = vmul.f32 %v2380, %v2446
  %v2637 = vmul.f32 %v2381, %v2448
  %v2638 = vmul.f32 %v2382, %v2450
  %v2639 = vmul.f32 %v2383, %v2452
  %v2640 = vmul.f32 %v2384, %v2454
  %v2641 = vmul.f32 %v2385, %v2456
  %v2642 = vmul.f32 %v2386, %v2458
  %v2643 = vmul.f32 %v2387, %v2460
  %v2644 = vmul.f32 %v2388, %v2462
  %v2645 = vmul.f32 %v2389, %v2464
  %v2646 = vmul.f32 %v2390, %v2466
  %v2647 = vmul.f32 %v2391, %v2468
  %v2648 = vmul.f32 %v2392, %v2470
  %v2649 = vmul.f32 %v2393, %v2472
  %v2650 = vmul.f32 %v2394, %v2474
  %v2651 = vmul.f32 %v2395, %v2476
  %v2652 = vmul.f32 %v2396, %v2478
  %v2653 = vmul.f32 %v2397, %v2480
  %v2654 = vmul.f32 %v2398, %v2482
  %v2655 = vmul.f32 %v2399, %v2484
  %v2656 = vmul.f32 %v2400, %v2486
  %v2657 = vmul.f32 %v2401, %v2488
  %v2658 = vmul.f32 %v2402, %v2490
  %v2659 = vmul.f32 %v2403, %v2492
  %v2660 = vmul.f32 %v2404, %v2494
  %v2661 = vmul.f32 %v2405, %v2496
  %v2662 = vmul.f32 %v2406, %v2498
  %v2663 = vmul.f32 %v2407, %v2500
  %v2664 = vmul.f32 %v2408, %v2502
  %v2665 = vmul.f32 %v2409, %v2504
  %v2666 = vmul.f32 %v2410, %v2506
  %v2667 = vmul.f32 %v2411, %v2508
  %v2668 = vmul.f32 %v2412, %v2510
  %v2669 = vmul.f32 %v2413, %v2512
  %v2670 = vmul.f32 %v2414, %v2514
  %v2671 = vmul.f32 %v2415, %v2516
  %v2672 = vmul.f32 %v2416, %v2518
  %v2673 = vmul.f32 %v2417, %v2520
  %v2674 = vmul.f32 %v2418, %v2522
  %v2675 = vmul.f32 %v2419, %v2524
  %v2676 = vmul.f32 %v2420, %v2526
  %v2677 = vmul.f32 %v2421, %v2528
  %v2678 = vmul.f32 %v2422, %v2530
  %v2679 = vmul.f32 %v2423, %v2532
  %v2680 = vmul.f32 %v2424, %v2534
  %v2681 = vmul.f32 %v2425, %v2536
  %v2682 = vmul.f32 %v2426, %v2538
  %v2683 = vmul.f32 %v2427, %v2540
  %v2684 = vmul.f32 %v2428, %v2542
  %v2685 = vmul.f32 %v2429, %v2544
  %v2686 = vmul.f32 %v2430, %v2546
  %v2687 = vmul.f32 %v2431, %v2548
  %v2688 = vmul.f32 %v2432, %v2550
  %v2689 = vmul.f32 %v2433, %v2552
  %v2690 = vmul.f32 %v2434, %v2554
  %v2691 = vmul.f32 %v2435, %v2556
  %v2692 = vmul.f32 %v2436, %v2558
  %v2693 = vmul.f32 %v2437, %v2560
  %v2694 = vmul.f32 %v2438, %v2562
  %v2695 = vmul.f32 %v2439, %v2564
  %v2696 = vmul.f32 %v2440, %v2566
  %v2697 = vmul.f32 %v2441, %v2568
  %v2698 = vmul.f32 %v2442, %v2570
  %2763 = vrot.lane.b32.xlu0 %v2635, 125
  %v2764 = vpop.permute.xlu0 %2763
  %2765 = vrot.lane.b32.xlu0 %v2636, 125
  %v2766 = vpop.permute.xlu0 %2765
  %2767 = vrot.lane.b32.xlu0 %v2637, 125
  %v2768 = vpop.permute.xlu0 %2767
  %2769 = vrot.lane.b32.xlu0 %v2638, 125
  %v2770 = vpop.permute.xlu0 %2769
  %2771 = vrot.lane.b32.xlu0 %v2639, 125
  %v2772 = vpop.permute.xlu0 %2771
  %2773 = vrot.lane.b32.xlu0 %v2640, 125
  %v2774 = vpop.permute.xlu0 %2773
  %2775 = vrot.lane.b32.xlu0 %v2641, 125
  %v2776 = vpop.permute.xlu0 %2775
  %2777 = vrot.lane.b32.xlu0 %v2642, 125
  %v2778 = vpop.permute.xlu0 %2777
  %2779 = vrot.lane.b32.xlu0 %v2643, 125
  %v2780 = vpop.permute.xlu0 %2779
  %2781 = vrot.lane.b32.xlu0 %v2644, 125
  %v2782 = vpop.permute.xlu0 %2781
  %2783 = vrot.lane.b32.xlu0 %v2645, 125
  %v2784 = vpop.permute.xlu0 %2783
  %2785 = vrot.lane.b32.xlu0 %v2646, 125
  %v2786 = vpop.permute.xlu0 %2785
  %2787 = vrot.lane.b32.xlu0 %v2647, 125
  %v2788 = vpop.permute.xlu0 %2787
  %2789 = vrot.lane.b32.xlu0 %v2648, 125
  %v2790 = vpop.permute.xlu0 %2789
  %2791 = vrot.lane.b32.xlu0 %v2649, 125
  %v2792 = vpop.permute.xlu0 %2791
  %2793 = vrot.lane.b32.xlu0 %v2650, 125
  %v2794 = vpop.permute.xlu0 %2793
  %2795 = vrot.lane.b32.xlu0 %v2651, 125
  %v2796 = vpop.permute.xlu0 %2795
  %2797 = vrot.lane.b32.xlu0 %v2652, 125
  %v2798 = vpop.permute.xlu0 %2797
  %2799 = vrot.lane.b32.xlu0 %v2653, 125
  %v2800 = vpop.permute.xlu0 %2799
  %2801 = vrot.lane.b32.xlu0 %v2654, 125
  %v2802 = vpop.permute.xlu0 %2801
  %2803 = vrot.lane.b32.xlu0 %v2655, 125
  %v2804 = vpop.permute.xlu0 %2803
  %2805 = vrot.lane.b32.xlu0 %v2656, 125
  %v2806 = vpop.permute.xlu0 %2805
  %2807 = vrot.lane.b32.xlu0 %v2657, 125
  %v2808 = vpop.permute.xlu0 %2807
  %2809 = vrot.lane.b32.xlu0 %v2658, 125
  %v2810 = vpop.permute.xlu0 %2809
  %2811 = vrot.lane.b32.xlu0 %v2659, 125
  %v2812 = vpop.permute.xlu0 %2811
  %2813 = vrot.lane.b32.xlu0 %v2660, 125
  %v2814 = vpop.permute.xlu0 %2813
  %2815 = vrot.lane.b32.xlu0 %v2661, 125
  %v2816 = vpop.permute.xlu0 %2815
  %2817 = vrot.lane.b32.xlu0 %v2662, 125
  %v2818 = vpop.permute.xlu0 %2817
  %2819 = vrot.lane.b32.xlu0 %v2663, 125
  %v2820 = vpop.permute.xlu0 %2819
  %2821 = vrot.lane.b32.xlu0 %v2664, 125
  %v2822 = vpop.permute.xlu0 %2821
  %2823 = vrot.lane.b32.xlu0 %v2665, 125
  %v2824 = vpop.permute.xlu0 %2823
  %2825 = vrot.lane.b32.xlu0 %v2666, 125
  %v2826 = vpop.permute.xlu0 %2825
  %2827 = vrot.lane.b32.xlu0 %v2667, 125
  %v2828 = vpop.permute.xlu0 %2827
  %2829 = vrot.lane.b32.xlu0 %v2668, 125
  %v2830 = vpop.permute.xlu0 %2829
  %2831 = vrot.lane.b32.xlu0 %v2669, 125
  %v2832 = vpop.permute.xlu0 %2831
  %2833 = vrot.lane.b32.xlu0 %v2670, 125
  %v2834 = vpop.permute.xlu0 %2833
  %2835 = vrot.lane.b32.xlu0 %v2671, 125
  %v2836 = vpop.permute.xlu0 %2835
  %2837 = vrot.lane.b32.xlu0 %v2672, 125
  %v2838 = vpop.permute.xlu0 %2837
  %2839 = vrot.lane.b32.xlu0 %v2673, 125
  %v2840 = vpop.permute.xlu0 %2839
  %2841 = vrot.lane.b32.xlu0 %v2674, 125
  %v2842 = vpop.permute.xlu0 %2841
  %2843 = vrot.lane.b32.xlu0 %v2675, 125
  %v2844 = vpop.permute.xlu0 %2843
  %2845 = vrot.lane.b32.xlu0 %v2676, 125
  %v2846 = vpop.permute.xlu0 %2845
  %2847 = vrot.lane.b32.xlu0 %v2677, 125
  %v2848 = vpop.permute.xlu0 %2847
  %2849 = vrot.lane.b32.xlu0 %v2678, 125
  %v2850 = vpop.permute.xlu0 %2849
  %2851 = vrot.lane.b32.xlu0 %v2679, 125
  %v2852 = vpop.permute.xlu0 %2851
  %2853 = vrot.lane.b32.xlu0 %v2680, 125
  %v2854 = vpop.permute.xlu0 %2853
  %2855 = vrot.lane.b32.xlu0 %v2681, 125
  %v2856 = vpop.permute.xlu0 %2855
  %2857 = vrot.lane.b32.xlu0 %v2682, 125
  %v2858 = vpop.permute.xlu0 %2857
  %2859 = vrot.lane.b32.xlu0 %v2683, 125
  %v2860 = vpop.permute.xlu0 %2859
  %2861 = vrot.lane.b32.xlu0 %v2684, 125
  %v2862 = vpop.permute.xlu0 %2861
  %2863 = vrot.lane.b32.xlu0 %v2685, 125
  %v2864 = vpop.permute.xlu0 %2863
  %2865 = vrot.lane.b32.xlu0 %v2686, 125
  %v2866 = vpop.permute.xlu0 %2865
  %2867 = vrot.lane.b32.xlu0 %v2687, 125
  %v2868 = vpop.permute.xlu0 %2867
  %2869 = vrot.lane.b32.xlu0 %v2688, 125
  %v2870 = vpop.permute.xlu0 %2869
  %2871 = vrot.lane.b32.xlu0 %v2689, 125
  %v2872 = vpop.permute.xlu0 %2871
  %2873 = vrot.lane.b32.xlu0 %v2690, 125
  %v2874 = vpop.permute.xlu0 %2873
  %2875 = vrot.lane.b32.xlu0 %v2691, 125
  %v2876 = vpop.permute.xlu0 %2875
  %2877 = vrot.lane.b32.xlu0 %v2692, 125
  %v2878 = vpop.permute.xlu0 %2877
  %2879 = vrot.lane.b32.xlu0 %v2693, 125
  %v2880 = vpop.permute.xlu0 %2879
  %2881 = vrot.lane.b32.xlu0 %v2694, 125
  %v2882 = vpop.permute.xlu0 %2881
  %2883 = vrot.lane.b32.xlu0 %v2695, 125
  %v2884 = vpop.permute.xlu0 %2883
  %2885 = vrot.lane.b32.xlu0 %v2696, 125
  %v2886 = vpop.permute.xlu0 %2885
  %2887 = vrot.lane.b32.xlu0 %v2697, 125
  %v2888 = vpop.permute.xlu0 %2887
  %2889 = vrot.lane.b32.xlu0 %v2698, 125
  %v2890 = vpop.permute.xlu0 %2889
  %vm2955 = vcmask 1048568
  %2956 = vst.msk [vmem:[%s2] sm:$0xff] %vm2955, %v2764
  %2957 = vst.msk [vmem:[%s2 + $0x8] sm:$0xff] %vm2955, %v2766
  %2958 = vst.msk [vmem:[%s2 + $0x10] sm:$0xff] %vm2955, %v2768
  %2959 = vst.msk [vmem:[%s2 + $0x18] sm:$0xff] %vm2955, %v2770
  %2960 = vst.msk [vmem:[%s2 + $0x20] sm:$0xff] %vm2955, %v2772
  %2961 = vst.msk [vmem:[%s2 + $0x28] sm:$0xff] %vm2955, %v2774
  %2962 = vst.msk [vmem:[%s2 + $0x30] sm:$0xff] %vm2955, %v2776
  %2963 = vst.msk [vmem:[%s2 + $0x38] sm:$0xff] %vm2955, %v2778
  %2964 = vst.msk [vmem:[%s2 + $0x40] sm:$0xff] %vm2955, %v2780
  %2965 = vst.msk [vmem:[%s2 + $0x48] sm:$0xff] %vm2955, %v2782
  %2966 = vst.msk [vmem:[%s2 + $0x50] sm:$0xff] %vm2955, %v2784
  %2967 = vst.msk [vmem:[%s2 + $0x58] sm:$0xff] %vm2955, %v2786
  %2968 = vst.msk [vmem:[%s2 + $0x60] sm:$0xff] %vm2955, %v2788
  %2969 = vst.msk [vmem:[%s2 + $0x68] sm:$0xff] %vm2955, %v2790
  %2970 = vst.msk [vmem:[%s2 + $0x70] sm:$0xff] %vm2955, %v2792
  %2971 = vst.msk [vmem:[%s2 + $0x78] sm:$0xff] %vm2955, %v2794
  %2972 = vst.msk [vmem:[%s2 + $0x80] sm:$0xff] %vm2955, %v2796
  %2973 = vst.msk [vmem:[%s2 + $0x88] sm:$0xff] %vm2955, %v2798
  %2974 = vst.msk [vmem:[%s2 + $0x90] sm:$0xff] %vm2955, %v2800
  %2975 = vst.msk [vmem:[%s2 + $0x98] sm:$0xff] %vm2955, %v2802
  %2976 = vst.msk [vmem:[%s2 + $0xa0] sm:$0xff] %vm2955, %v2804
  %2977 = vst.msk [vmem:[%s2 + $0xa8] sm:$0xff] %vm2955, %v2806
  %2978 = vst.msk [vmem:[%s2 + $0xb0] sm:$0xff] %vm2955, %v2808
  %2979 = vst.msk [vmem:[%s2 + $0xb8] sm:$0xff] %vm2955, %v2810
  %2980 = vst.msk [vmem:[%s2 + $0xc0] sm:$0xff] %vm2955, %v2812
  %2981 = vst.msk [vmem:[%s2 + $0xc8] sm:$0xff] %vm2955, %v2814
  %2982 = vst.msk [vmem:[%s2 + $0xd0] sm:$0xff] %vm2955, %v2816
  %2983 = vst.msk [vmem:[%s2 + $0xd8] sm:$0xff] %vm2955, %v2818
  %2984 = vst.msk [vmem:[%s2 + $0xe0] sm:$0xff] %vm2955, %v2820
  %2985 = vst.msk [vmem:[%s2 + $0xe8] sm:$0xff] %vm2955, %v2822
  %2986 = vst.msk [vmem:[%s2 + $0xf0] sm:$0xff] %vm2955, %v2824
  %2987 = vst.msk [vmem:[%s2 + $0xf8] sm:$0xff] %vm2955, %v2826
  %2988 = vst.msk [vmem:[%s2 + $0x100] sm:$0xff] %vm2955, %v2828
  %2989 = vst.msk [vmem:[%s2 + $0x108] sm:$0xff] %vm2955, %v2830
  %2990 = vst.msk [vmem:[%s2 + $0x110] sm:$0xff] %vm2955, %v2832
  %2991 = vst.msk [vmem:[%s2 + $0x118] sm:$0xff] %vm2955, %v2834
  %2992 = vst.msk [vmem:[%s2 + $0x120] sm:$0xff] %vm2955, %v2836
  %2993 = vst.msk [vmem:[%s2 + $0x128] sm:$0xff] %vm2955, %v2838
  %2994 = vst.msk [vmem:[%s2 + $0x130] sm:$0xff] %vm2955, %v2840
  %2995 = vst.msk [vmem:[%s2 + $0x138] sm:$0xff] %vm2955, %v2842
  %2996 = vst.msk [vmem:[%s2 + $0x140] sm:$0xff] %vm2955, %v2844
  %2997 = vst.msk [vmem:[%s2 + $0x148] sm:$0xff] %vm2955, %v2846
  %2998 = vst.msk [vmem:[%s2 + $0x150] sm:$0xff] %vm2955, %v2848
  %2999 = vst.msk [vmem:[%s2 + $0x158] sm:$0xff] %vm2955, %v2850
  %3000 = vst.msk [vmem:[%s2 + $0x160] sm:$0xff] %vm2955, %v2852
  %3001 = vst.msk [vmem:[%s2 + $0x168] sm:$0xff] %vm2955, %v2854
  %3002 = vst.msk [vmem:[%s2 + $0x170] sm:$0xff] %vm2955, %v2856
  %3003 = vst.msk [vmem:[%s2 + $0x178] sm:$0xff] %vm2955, %v2858
  %3004 = vst.msk [vmem:[%s2 + $0x180] sm:$0xff] %vm2955, %v2860
  %3005 = vst.msk [vmem:[%s2 + $0x188] sm:$0xff] %vm2955, %v2862
  %3006 = vst.msk [vmem:[%s2 + $0x190] sm:$0xff] %vm2955, %v2864
  %3007 = vst.msk [vmem:[%s2 + $0x198] sm:$0xff] %vm2955, %v2866
  %3008 = vst.msk [vmem:[%s2 + $0x1a0] sm:$0xff] %vm2955, %v2868
  %3009 = vst.msk [vmem:[%s2 + $0x1a8] sm:$0xff] %vm2955, %v2870
  %3010 = vst.msk [vmem:[%s2 + $0x1b0] sm:$0xff] %vm2955, %v2872
  %3011 = vst.msk [vmem:[%s2 + $0x1b8] sm:$0xff] %vm2955, %v2874
  %3012 = vst.msk [vmem:[%s2 + $0x1c0] sm:$0xff] %vm2955, %v2876
  %3013 = vst.msk [vmem:[%s2 + $0x1c8] sm:$0xff] %vm2955, %v2878
  %3014 = vst.msk [vmem:[%s2 + $0x1d0] sm:$0xff] %vm2955, %v2880
  %3015 = vst.msk [vmem:[%s2 + $0x1d8] sm:$0xff] %vm2955, %v2882
  %3016 = vst.msk [vmem:[%s2 + $0x1e0] sm:$0xff] %vm2955, %v2884
  %3017 = vst.msk [vmem:[%s2 + $0x1e8] sm:$0xff] %vm2955, %v2886
  %3018 = vst.msk [vmem:[%s2 + $0x1f0] sm:$0xff] %vm2955, %v2888
  %3019 = vst.msk [vmem:[%s2 + $0x1f8] sm:$0xff] %vm2955, %v2890
  // Predicated region
  $region10: #{tpu_custom_call.1} parent=0 // pred_check
    _
  $region11: #{tpu_custom_call.1} parent=0 // pred_check_branch
    %3021 = sbr.rel (0) target = $region13
  $region12: #{tpu_custom_call.1} parent=0 // pred_region
    _
  $region13: #{tpu_custom_call.1} parent=0 // pred_fallthru
    _
  // Predicated region
  $region14: #{tpu_custom_call.1} parent=0 // pred_check
    _
  $region15: #{tpu_custom_call.1} parent=0 // pred_check_branch
    %3023 = sbr.rel (0) target = $region17
  $region16: #{tpu_custom_call.1} parent=0 // pred_region
    _
  $region17: #{tpu_custom_call.1} parent=0 // pred_fallthru
    _

</llo_original>
